<compile_context>
chip_gen: v5e
topology: v5e:2x2
jax: 0.10.0
libtpu: 0.0.40
codegen_flags: <defaults>
</compile_context>

<pallas_src>
import jax
import jax.numpy as jnp
from jax.experimental import pallas as pl
from jax.experimental.pallas import tpu as pltpu


def _resample_kernel(u_ref, ring_ref, c_ref, rs_ring_ref, rs_c_ref):
    # u_ref:       (1, S, FT)   uniform [0, 1) samples (one per output sample)
    # ring_ref:    (1, N, FT)   original n-ring face ids (pass-through tail)
    # c_ref:       (1, 9, N, FT) neighbor corners, (corner*3 + xyz) on dim 1
    # rs_ring_ref: (1, NS, FT)  out: [0:S] sampled neighbor idx, [S:] original ring
    # rs_c_ref:    (1, 9, NS, FT) out: corners, same [0:S]/[S:] split
    _, _, N, FT = c_ref.shape
    _, S, _ = u_ref.shape

    c = c_ref[0]                       # (9, N, FT)
    p1 = c[0:3]                        # corner 0 xyz, (3, N, FT)
    p2 = c[3:6]                        # corner 1 xyz
    p3 = c[6:9]                        # corner 2 xyz

    d12 = jnp.sqrt(jnp.sum((p1 - p2) ** 2, axis=0))   # (N, FT)
    d23 = jnp.sqrt(jnp.sum((p2 - p3) ** 2, axis=0))
    d31 = jnp.sqrt(jnp.sum((p3 - p1) ** 2, axis=0))
    perim = d12 + d23 + d31                            # (N, FT) sampling weights

    # Inclusive cumulative sum over the small, static neighbor axis.
    running = jnp.zeros((1, FT), jnp.float32)
    cums = []
    for n in range(N):
        running = running + perim[n:n + 1, :]
        cums.append(running)
    total = running                                    # (1, FT)

    # Multinomial with replacement via inverse CDF on precomputed uniforms.
    u = u_ref[0]                                       # (S, FT)
    thresh = u * total                                 # (S, FT)

    idx = jnp.zeros((S, FT), jnp.int32)
    for n in range(N):
        idx = idx + (cums[n] <= thresh).astype(jnp.int32)
    # Guard degenerate all-zero-perimeter rows (and FP boundary cases).
    idx = jnp.minimum(idx, N - 1)

    # Sampled neighbor indices (stored as float32, matching the torch concat),
    # followed by the original ring — the concatenation happens in-kernel.
    rs_ring_ref[0, pl.ds(0, S), :] = idx.astype(jnp.float32)
    rs_ring_ref[0, pl.ds(S, N), :] = ring_ref[0]

    # Gather corners of the sampled neighbors with fused compare-select-add,
    # one of the 9 xyz/corner components per pass (keeps vreg pressure low,
    # each output store is a contiguous lane-dense (S, FT) slab).
    for j in range(9):
        acc = jnp.zeros((S, FT), jnp.float32)
        for n in range(N):
            acc = acc + jnp.where(idx == n, c[j, n, :][None, :], 0.0)
        rs_c_ref[0, j, pl.ds(0, S), :] = acc

    # Pass-through tail: original neighbor corners.
    rs_c_ref[0, :, pl.ds(S, N), :] = c


def neighbor_resample_weighted(ring_n, neighbor_corners, num_samples=24, key=None):
    """ring_n: [M, F, N]; neighbor_corners: [M, F, N, 3, 3] (float32)."""
    M, F, N = ring_n.shape
    S = num_samples - N
    if key is None:
        key = jax.random.PRNGKey(0)

    # Lane-dense layout: faces on the last (lane) axis.
    corners_t = jnp.transpose(
        neighbor_corners.reshape(M, F, N, 9).astype(jnp.float32), (0, 3, 2, 1))  # (M, 9, N, F)
    ring_t = jnp.transpose(ring_n.astype(jnp.float32), (0, 2, 1))                # (M, N, F)
    # Uniforms for the multinomial draw (TPU-only PRNG primitives avoided).
    u = jax.random.uniform(key, (M, S, F), dtype=jnp.float32)

    # Largest lane-aligned F tile that divides F (block stays far under the
    # scoped VMEM limit on v5e/v6e/v7x even at 1024 lanes).
    f_tile = F
    for cand in (1024, 512, 256, 128):
        if F % cand == 0:
            f_tile = cand
            break
    grid = (M, F // f_tile)

    grid_spec = pltpu.PrefetchScalarGridSpec(
        num_scalar_prefetch=0,
        grid=grid,
        in_specs=[
            pl.BlockSpec((1, S, f_tile), lambda m, f: (m, 0, f)),
            pl.BlockSpec((1, N, f_tile), lambda m, f: (m, 0, f)),
            pl.BlockSpec((1, 9, N, f_tile), lambda m, f: (m, 0, 0, f)),
        ],
        out_specs=[
            pl.BlockSpec((1, num_samples, f_tile), lambda m, f: (m, 0, f)),
            pl.BlockSpec((1, 9, num_samples, f_tile), lambda m, f: (m, 0, 0, f)),
        ],
    )

    rs_ring_t, rs_c_t = pl.pallas_call(
        _resample_kernel,
        out_shape=(
            jax.ShapeDtypeStruct((M, num_samples, F), jnp.float32),
            jax.ShapeDtypeStruct((M, 9, num_samples, F), jnp.float32),
        ),
        grid_spec=grid_spec,
        compiler_params=pltpu.CompilerParams(
            dimension_semantics=("parallel", "parallel")),
    )(u, ring_t, corners_t)

    # Back to the module's layout.
    rs_ring_n = jnp.transpose(rs_ring_t, (0, 2, 1))                    # (M, F, NS)
    rs_neighbor_corners = jnp.transpose(rs_c_t, (0, 3, 2, 1)).reshape(
        M, F, num_samples, 3, 3)                                       # (M, F, NS, 3, 3)
    return rs_ring_n, rs_neighbor_corners


if __name__ == "__main__":
    key = jax.random.PRNGKey(0)
    k1, k2, k3 = jax.random.split(key, 3)

    M, F, N = 2, 256, 8          # num_meshes, num_faces, num_neighbor
    NUM_SAMPLES = 24             # module default
    S = NUM_SAMPLES - N

    # ring_n holds face ids of the n-ring neighborhood (stored as float,
    # matching the torch module which concatenates it with a float tensor).
    ring_n = jax.random.randint(k1, (M, F, N), 0, 1000).astype(jnp.float32)
    neighbor_corners = jax.random.normal(k2, (M, F, N, 3, 3), dtype=jnp.float32)

    rs_ring_n, rs_neighbor_corners = neighbor_resample_weighted(
        ring_n, neighbor_corners, num_samples=NUM_SAMPLES, key=k3)
    jax.block_until_ready((rs_ring_n, rs_neighbor_corners))

    # ---- sanity checks -------------------------------------------------------
    assert rs_ring_n.shape == (M, F, NUM_SAMPLES)
    assert rs_neighbor_corners.shape == (M, F, NUM_SAMPLES, 3, 3)

    # sampled indices in range [0, N)
    rs_idx = rs_ring_n[:, :, :S].astype(jnp.int32)
    assert bool(jnp.all((rs_idx >= 0) & (rs_idx < N)))

    # gathered corners agree with a plain-JAX gather using the same indices
    idx_b = jnp.broadcast_to(rs_idx[:, :, :, None, None], (M, F, S, 3, 3))
    ref_gather = jnp.take_along_axis(neighbor_corners, idx_b, axis=2)
    assert bool(jnp.allclose(rs_neighbor_corners[:, :, :S], ref_gather, atol=1e-5))

    # tail of outputs is the original (un-resampled) neighborhood
    assert bool(jnp.allclose(rs_ring_n[:, :, S:], ring_n))
    assert bool(jnp.allclose(rs_neighbor_corners[:, :, S:], neighbor_corners))

    print("KERNEL_OK")
</pallas_src>

<mosaic_0001>
module attributes {stable_mosaic.version = 11 : i64} {
  func.func @_resample_kernel(%arg0: i32, %arg1: i32, %arg2: memref<1x16x256xf32, #tpu.memory_space<vmem>>, %arg3: memref<1x8x256xf32, #tpu.memory_space<vmem>>, %arg4: memref<1x9x8x256xf32, #tpu.memory_space<vmem>>, %arg5: memref<1x24x256xf32, #tpu.memory_space<vmem>>, %arg6: memref<1x9x24x256xf32, #tpu.memory_space<vmem>>) attributes {dimension_semantics = [#tpu.dimension_semantics<parallel>, #tpu.dimension_semantics<parallel>], iteration_bounds = array<i64: 2, 1>, scalar_prefetch = 0 : i64, scratch_operands = 0 : i64, tpu.core_type = #tpu.core_type<tc>, window_params = [{transform_indices = @transform_0, window_bounds = array<i64: 1, 16, 256>}, {transform_indices = @transform_1, window_bounds = array<i64: 1, 8, 256>}, {transform_indices = @transform_2, window_bounds = array<i64: 1, 9, 8, 256>}, {transform_indices = @transform_3, window_bounds = array<i64: 1, 24, 256>}, {transform_indices = @transform_4, window_bounds = array<i64: 1, 9, 24, 256>}]} {
    %c0 = arith.constant 0 : index
    %c0_0 = arith.constant 0 : index
    %c0_1 = arith.constant 0 : index
    %c0_2 = arith.constant 0 : index
    %0 = vector.load %arg4[%c0, %c0_0, %c0_1, %c0_2] : memref<1x9x8x256xf32, #tpu.memory_space<vmem>>, vector<1x9x8x256xf32>
    %1 = vector.shape_cast %0 : vector<1x9x8x256xf32> to vector<9x8x256xf32>
    %2 = vector.extract_strided_slice %1 {offsets = [0, 0, 0], sizes = [3, 8, 256], strides = [1, 1, 1]} : vector<9x8x256xf32> to vector<3x8x256xf32>
    %3 = vector.extract_strided_slice %1 {offsets = [3, 0, 0], sizes = [3, 8, 256], strides = [1, 1, 1]} : vector<9x8x256xf32> to vector<3x8x256xf32>
    %4 = vector.extract_strided_slice %1 {offsets = [6, 0, 0], sizes = [3, 8, 256], strides = [1, 1, 1]} : vector<9x8x256xf32> to vector<3x8x256xf32>
    %5 = arith.subf %2, %3 : vector<3x8x256xf32>
    %6 = arith.mulf %5, %5 : vector<3x8x256xf32>
    %cst = arith.constant dense<0.000000e+00> : vector<8x256xf32>
    %7 = vector.multi_reduction <add>, %6, %cst [0] : vector<3x8x256xf32> to vector<8x256xf32>
    %8 = math.sqrt %7 : vector<8x256xf32>
    %9 = arith.subf %3, %4 : vector<3x8x256xf32>
    %10 = arith.mulf %9, %9 : vector<3x8x256xf32>
    %cst_3 = arith.constant dense<0.000000e+00> : vector<8x256xf32>
    %11 = vector.multi_reduction <add>, %10, %cst_3 [0] : vector<3x8x256xf32> to vector<8x256xf32>
    %12 = math.sqrt %11 : vector<8x256xf32>
    %13 = arith.subf %4, %2 : vector<3x8x256xf32>
    %14 = arith.mulf %13, %13 : vector<3x8x256xf32>
    %cst_4 = arith.constant dense<0.000000e+00> : vector<8x256xf32>
    %15 = vector.multi_reduction <add>, %14, %cst_4 [0] : vector<3x8x256xf32> to vector<8x256xf32>
    %16 = math.sqrt %15 : vector<8x256xf32>
    %17 = arith.addf %8, %12 : vector<8x256xf32>
    %18 = arith.addf %17, %16 : vector<8x256xf32>
    %cst_5 = arith.constant 0.000000e+00 : f32
    %19 = vector.broadcast %cst_5 : f32 to vector<1x256xf32>
    %20 = vector.extract_strided_slice %18 {offsets = [0, 0], sizes = [1, 256], strides = [1, 1]} : vector<8x256xf32> to vector<1x256xf32>
    %21 = arith.addf %19, %20 : vector<1x256xf32>
    %22 = vector.extract_strided_slice %18 {offsets = [1, 0], sizes = [1, 256], strides = [1, 1]} : vector<8x256xf32> to vector<1x256xf32>
    %23 = arith.addf %21, %22 : vector<1x256xf32>
    %24 = vector.extract_strided_slice %18 {offsets = [2, 0], sizes = [1, 256], strides = [1, 1]} : vector<8x256xf32> to vector<1x256xf32>
    %25 = arith.addf %23, %24 : vector<1x256xf32>
    %26 = vector.extract_strided_slice %18 {offsets = [3, 0], sizes = [1, 256], strides = [1, 1]} : vector<8x256xf32> to vector<1x256xf32>
    %27 = arith.addf %25, %26 : vector<1x256xf32>
    %28 = vector.extract_strided_slice %18 {offsets = [4, 0], sizes = [1, 256], strides = [1, 1]} : vector<8x256xf32> to vector<1x256xf32>
    %29 = arith.addf %27, %28 : vector<1x256xf32>
    %30 = vector.extract_strided_slice %18 {offsets = [5, 0], sizes = [1, 256], strides = [1, 1]} : vector<8x256xf32> to vector<1x256xf32>
    %31 = arith.addf %29, %30 : vector<1x256xf32>
    %32 = vector.extract_strided_slice %18 {offsets = [6, 0], sizes = [1, 256], strides = [1, 1]} : vector<8x256xf32> to vector<1x256xf32>
    %33 = arith.addf %31, %32 : vector<1x256xf32>
    %34 = vector.extract_strided_slice %18 {offsets = [7, 0], sizes = [1, 256], strides = [1, 1]} : vector<8x256xf32> to vector<1x256xf32>
    %35 = arith.addf %33, %34 : vector<1x256xf32>
    %c0_6 = arith.constant 0 : index
    %c0_7 = arith.constant 0 : index
    %c0_8 = arith.constant 0 : index
    %36 = vector.load %arg2[%c0_6, %c0_7, %c0_8] : memref<1x16x256xf32, #tpu.memory_space<vmem>>, vector<1x16x256xf32>
    %37 = vector.shape_cast %36 : vector<1x16x256xf32> to vector<16x256xf32>
    %38 = vector.broadcast %35 : vector<1x256xf32> to vector<16x256xf32>
    %39 = arith.mulf %37, %38 : vector<16x256xf32>
    %c0_i32 = arith.constant 0 : i32
    %40 = vector.broadcast %c0_i32 : i32 to vector<16x256xi32>
    %41 = vector.broadcast %21 : vector<1x256xf32> to vector<16x256xf32>
    %42 = arith.cmpf ole, %41, %39 : vector<16x256xf32>
    %43 = arith.extui %42 : vector<16x256xi1> to vector<16x256xi32>
    %44 = arith.addi %40, %43 : vector<16x256xi32>
    %45 = vector.broadcast %23 : vector<1x256xf32> to vector<16x256xf32>
    %46 = arith.cmpf ole, %45, %39 : vector<16x256xf32>
    %47 = arith.extui %46 : vector<16x256xi1> to vector<16x256xi32>
    %48 = arith.addi %44, %47 : vector<16x256xi32>
    %49 = vector.broadcast %25 : vector<1x256xf32> to vector<16x256xf32>
    %50 = arith.cmpf ole, %49, %39 : vector<16x256xf32>
    %51 = arith.extui %50 : vector<16x256xi1> to vector<16x256xi32>
    %52 = arith.addi %48, %51 : vector<16x256xi32>
    %53 = vector.broadcast %27 : vector<1x256xf32> to vector<16x256xf32>
    %54 = arith.cmpf ole, %53, %39 : vector<16x256xf32>
    %55 = arith.extui %54 : vector<16x256xi1> to vector<16x256xi32>
    %56 = arith.addi %52, %55 : vector<16x256xi32>
    %57 = vector.broadcast %29 : vector<1x256xf32> to vector<16x256xf32>
    %58 = arith.cmpf ole, %57, %39 : vector<16x256xf32>
    %59 = arith.extui %58 : vector<16x256xi1> to vector<16x256xi32>
    %60 = arith.addi %56, %59 : vector<16x256xi32>
    %61 = vector.broadcast %31 : vector<1x256xf32> to vector<16x256xf32>
    %62 = arith.cmpf ole, %61, %39 : vector<16x256xf32>
    %63 = arith.extui %62 : vector<16x256xi1> to vector<16x256xi32>
    %64 = arith.addi %60, %63 : vector<16x256xi32>
    %65 = vector.broadcast %33 : vector<1x256xf32> to vector<16x256xf32>
    %66 = arith.cmpf ole, %65, %39 : vector<16x256xf32>
    %67 = arith.extui %66 : vector<16x256xi1> to vector<16x256xi32>
    %68 = arith.addi %64, %67 : vector<16x256xi32>
    %69 = vector.broadcast %35 : vector<1x256xf32> to vector<16x256xf32>
    %70 = arith.cmpf ole, %69, %39 : vector<16x256xf32>
    %71 = arith.extui %70 : vector<16x256xi1> to vector<16x256xi32>
    %72 = arith.addi %68, %71 : vector<16x256xi32>
    %c7_i32 = arith.constant 7 : i32
    %73 = vector.broadcast %c7_i32 : i32 to vector<16x256xi32>
    %74 = arith.minsi %72, %73 : vector<16x256xi32>
    %75 = arith.sitofp %74 : vector<16x256xi32> to vector<16x256xf32>
    %c0_9 = arith.constant 0 : index
    %c0_10 = arith.constant 0 : index
    %c0_11 = arith.constant 0 : index
    %76 = vector.load %arg5[%c0_9, %c0_10, %c0_11] : memref<1x24x256xf32, #tpu.memory_space<vmem>>, vector<1x16x256xf32>
    %77 = vector.shape_cast %76 : vector<1x16x256xf32> to vector<16x256xf32>
    %78 = vector.shape_cast %75 : vector<16x256xf32> to vector<1x16x256xf32>
    tpu.vector_store %arg5[%c0_9, %c0_10, %c0_11], %78 {strides = array<i32>} : memref<1x24x256xf32, #tpu.memory_space<vmem>>, vector<1x16x256xf32>,
    %c0_12 = arith.constant 0 : index
    %c0_13 = arith.constant 0 : index
    %c0_14 = arith.constant 0 : index
    %79 = vector.load %arg3[%c0_12, %c0_13, %c0_14] : memref<1x8x256xf32, #tpu.memory_space<vmem>>, vector<1x8x256xf32>
    %80 = vector.shape_cast %79 : vector<1x8x256xf32> to vector<8x256xf32>
    %c0_15 = arith.constant 0 : index
    %c16 = arith.constant 16 : index
    %c0_16 = arith.constant 0 : index
    %81 = vector.load %arg5[%c0_15, %c16, %c0_16] : memref<1x24x256xf32, #tpu.memory_space<vmem>>, vector<1x8x256xf32>
    %82 = vector.shape_cast %81 : vector<1x8x256xf32> to vector<8x256xf32>
    %83 = vector.shape_cast %80 : vector<8x256xf32> to vector<1x8x256xf32>
    tpu.vector_store %arg5[%c0_15, %c16, %c0_16], %83 {strides = array<i32>} : memref<1x24x256xf32, #tpu.memory_space<vmem>>, vector<1x8x256xf32>,
    %cst_17 = arith.constant 0.000000e+00 : f32
    %84 = vector.broadcast %cst_17 : f32 to vector<16x256xf32>
    %c0_i32_18 = arith.constant 0 : i32
    %85 = vector.broadcast %c0_i32_18 : i32 to vector<16x256xi32>
    %86 = arith.cmpi eq, %74, %85 : vector<16x256xi32>
    %87 = vector.extract_strided_slice %1 {offsets = [0, 0, 0], sizes = [1, 1, 256], strides = [1, 1, 1]} : vector<9x8x256xf32> to vector<1x1x256xf32>
    %88 = vector.shape_cast %87 : vector<1x1x256xf32> to vector<256xf32>
    %89 = vector.shape_cast %88 : vector<256xf32> to vector<1x256xf32>
    %cst_19 = arith.constant 0.000000e+00 : f32
    %90 = vector.shape_cast %89 : vector<1x256xf32> to vector<1x256xf32>
    %91 = vector.broadcast %90 : vector<1x256xf32> to vector<16x256xf32>
    %92 = vector.broadcast %cst_19 : f32 to vector<16x256xf32>
    %93 = arith.select %86, %91, %92 : vector<16x256xi1>, vector<16x256xf32>
    %94 = arith.addf %84, %93 : vector<16x256xf32>
    %c1_i32 = arith.constant 1 : i32
    %95 = vector.broadcast %c1_i32 : i32 to vector<16x256xi32>
    %96 = arith.cmpi eq, %74, %95 : vector<16x256xi32>
    %97 = vector.extract_strided_slice %1 {offsets = [0, 1, 0], sizes = [1, 1, 256], strides = [1, 1, 1]} : vector<9x8x256xf32> to vector<1x1x256xf32>
    %98 = vector.shape_cast %97 : vector<1x1x256xf32> to vector<256xf32>
    %99 = vector.shape_cast %98 : vector<256xf32> to vector<1x256xf32>
    %cst_20 = arith.constant 0.000000e+00 : f32
    %100 = vector.shape_cast %99 : vector<1x256xf32> to vector<1x256xf32>
    %101 = vector.broadcast %100 : vector<1x256xf32> to vector<16x256xf32>
    %102 = vector.broadcast %cst_20 : f32 to vector<16x256xf32>
    %103 = arith.select %96, %101, %102 : vector<16x256xi1>, vector<16x256xf32>
    %104 = arith.addf %94, %103 : vector<16x256xf32>
    %c2_i32 = arith.constant 2 : i32
    %105 = vector.broadcast %c2_i32 : i32 to vector<16x256xi32>
    %106 = arith.cmpi eq, %74, %105 : vector<16x256xi32>
    %107 = vector.extract_strided_slice %1 {offsets = [0, 2, 0], sizes = [1, 1, 256], strides = [1, 1, 1]} : vector<9x8x256xf32> to vector<1x1x256xf32>
    %108 = vector.shape_cast %107 : vector<1x1x256xf32> to vector<256xf32>
    %109 = vector.shape_cast %108 : vector<256xf32> to vector<1x256xf32>
    %cst_21 = arith.constant 0.000000e+00 : f32
    %110 = vector.shape_cast %109 : vector<1x256xf32> to vector<1x256xf32>
    %111 = vector.broadcast %110 : vector<1x256xf32> to vector<16x256xf32>
    %112 = vector.broadcast %cst_21 : f32 to vector<16x256xf32>
    %113 = arith.select %106, %111, %112 : vector<16x256xi1>, vector<16x256xf32>
    %114 = arith.addf %104, %113 : vector<16x256xf32>
    %c3_i32 = arith.constant 3 : i32
    %115 = vector.broadcast %c3_i32 : i32 to vector<16x256xi32>
    %116 = arith.cmpi eq, %74, %115 : vector<16x256xi32>
    %117 = vector.extract_strided_slice %1 {offsets = [0, 3, 0], sizes = [1, 1, 256], strides = [1, 1, 1]} : vector<9x8x256xf32> to vector<1x1x256xf32>
    %118 = vector.shape_cast %117 : vector<1x1x256xf32> to vector<256xf32>
    %119 = vector.shape_cast %118 : vector<256xf32> to vector<1x256xf32>
    %cst_22 = arith.constant 0.000000e+00 : f32
    %120 = vector.shape_cast %119 : vector<1x256xf32> to vector<1x256xf32>
    %121 = vector.broadcast %120 : vector<1x256xf32> to vector<16x256xf32>
    %122 = vector.broadcast %cst_22 : f32 to vector<16x256xf32>
    %123 = arith.select %116, %121, %122 : vector<16x256xi1>, vector<16x256xf32>
    %124 = arith.addf %114, %123 : vector<16x256xf32>
    %c4_i32 = arith.constant 4 : i32
    %125 = vector.broadcast %c4_i32 : i32 to vector<16x256xi32>
    %126 = arith.cmpi eq, %74, %125 : vector<16x256xi32>
    %127 = vector.extract_strided_slice %1 {offsets = [0, 4, 0], sizes = [1, 1, 256], strides = [1, 1, 1]} : vector<9x8x256xf32> to vector<1x1x256xf32>
    %128 = vector.shape_cast %127 : vector<1x1x256xf32> to vector<256xf32>
    %129 = vector.shape_cast %128 : vector<256xf32> to vector<1x256xf32>
    %cst_23 = arith.constant 0.000000e+00 : f32
    %130 = vector.shape_cast %129 : vector<1x256xf32> to vector<1x256xf32>
    %131 = vector.broadcast %130 : vector<1x256xf32> to vector<16x256xf32>
    %132 = vector.broadcast %cst_23 : f32 to vector<16x256xf32>
    %133 = arith.select %126, %131, %132 : vector<16x256xi1>, vector<16x256xf32>
    %134 = arith.addf %124, %133 : vector<16x256xf32>
    %c5_i32 = arith.constant 5 : i32
    %135 = vector.broadcast %c5_i32 : i32 to vector<16x256xi32>
    %136 = arith.cmpi eq, %74, %135 : vector<16x256xi32>
    %137 = vector.extract_strided_slice %1 {offsets = [0, 5, 0], sizes = [1, 1, 256], strides = [1, 1, 1]} : vector<9x8x256xf32> to vector<1x1x256xf32>
    %138 = vector.shape_cast %137 : vector<1x1x256xf32> to vector<256xf32>
    %139 = vector.shape_cast %138 : vector<256xf32> to vector<1x256xf32>
    %cst_24 = arith.constant 0.000000e+00 : f32
    %140 = vector.shape_cast %139 : vector<1x256xf32> to vector<1x256xf32>
    %141 = vector.broadcast %140 : vector<1x256xf32> to vector<16x256xf32>
    %142 = vector.broadcast %cst_24 : f32 to vector<16x256xf32>
    %143 = arith.select %136, %141, %142 : vector<16x256xi1>, vector<16x256xf32>
    %144 = arith.addf %134, %143 : vector<16x256xf32>
    %c6_i32 = arith.constant 6 : i32
    %145 = vector.broadcast %c6_i32 : i32 to vector<16x256xi32>
    %146 = arith.cmpi eq, %74, %145 : vector<16x256xi32>
    %147 = vector.extract_strided_slice %1 {offsets = [0, 6, 0], sizes = [1, 1, 256], strides = [1, 1, 1]} : vector<9x8x256xf32> to vector<1x1x256xf32>
    %148 = vector.shape_cast %147 : vector<1x1x256xf32> to vector<256xf32>
    %149 = vector.shape_cast %148 : vector<256xf32> to vector<1x256xf32>
    %cst_25 = arith.constant 0.000000e+00 : f32
    %150 = vector.shape_cast %149 : vector<1x256xf32> to vector<1x256xf32>
    %151 = vector.broadcast %150 : vector<1x256xf32> to vector<16x256xf32>
    %152 = vector.broadcast %cst_25 : f32 to vector<16x256xf32>
    %153 = arith.select %146, %151, %152 : vector<16x256xi1>, vector<16x256xf32>
    %154 = arith.addf %144, %153 : vector<16x256xf32>
    %c7_i32_26 = arith.constant 7 : i32
    %155 = vector.broadcast %c7_i32_26 : i32 to vector<16x256xi32>
    %156 = arith.cmpi eq, %74, %155 : vector<16x256xi32>
    %157 = vector.extract_strided_slice %1 {offsets = [0, 7, 0], sizes = [1, 1, 256], strides = [1, 1, 1]} : vector<9x8x256xf32> to vector<1x1x256xf32>
    %158 = vector.shape_cast %157 : vector<1x1x256xf32> to vector<256xf32>
    %159 = vector.shape_cast %158 : vector<256xf32> to vector<1x256xf32>
    %cst_27 = arith.constant 0.000000e+00 : f32
    %160 = vector.shape_cast %159 : vector<1x256xf32> to vector<1x256xf32>
    %161 = vector.broadcast %160 : vector<1x256xf32> to vector<16x256xf32>
    %162 = vector.broadcast %cst_27 : f32 to vector<16x256xf32>
    %163 = arith.select %156, %161, %162 : vector<16x256xi1>, vector<16x256xf32>
    %164 = arith.addf %154, %163 : vector<16x256xf32>
    %c0_28 = arith.constant 0 : index
    %c0_29 = arith.constant 0 : index
    %c0_30 = arith.constant 0 : index
    %c0_31 = arith.constant 0 : index
    %165 = vector.load %arg6[%c0_28, %c0_29, %c0_30, %c0_31] : memref<1x9x24x256xf32, #tpu.memory_space<vmem>>, vector<1x1x16x256xf32>
    %166 = vector.shape_cast %165 : vector<1x1x16x256xf32> to vector<16x256xf32>
    %167 = vector.shape_cast %164 : vector<16x256xf32> to vector<1x1x16x256xf32>
    tpu.vector_store %arg6[%c0_28, %c0_29, %c0_30, %c0_31], %167 {strides = array<i32>} : memref<1x9x24x256xf32, #tpu.memory_space<vmem>>, vector<1x1x16x256xf32>,
    %cst_32 = arith.constant 0.000000e+00 : f32
    %168 = vector.broadcast %cst_32 : f32 to vector<16x256xf32>
    %c0_i32_33 = arith.constant 0 : i32
    %169 = vector.broadcast %c0_i32_33 : i32 to vector<16x256xi32>
    %170 = arith.cmpi eq, %74, %169 : vector<16x256xi32>
    %171 = vector.extract_strided_slice %1 {offsets = [1, 0, 0], sizes = [1, 1, 256], strides = [1, 1, 1]} : vector<9x8x256xf32> to vector<1x1x256xf32>
    %172 = vector.shape_cast %171 : vector<1x1x256xf32> to vector<256xf32>
    %173 = vector.shape_cast %172 : vector<256xf32> to vector<1x256xf32>
    %cst_34 = arith.constant 0.000000e+00 : f32
    %174 = vector.shape_cast %173 : vector<1x256xf32> to vector<1x256xf32>
    %175 = vector.broadcast %174 : vector<1x256xf32> to vector<16x256xf32>
    %176 = vector.broadcast %cst_34 : f32 to vector<16x256xf32>
    %177 = arith.select %170, %175, %176 : vector<16x256xi1>, vector<16x256xf32>
    %178 = arith.addf %168, %177 : vector<16x256xf32>
    %c1_i32_35 = arith.constant 1 : i32
    %179 = vector.broadcast %c1_i32_35 : i32 to vector<16x256xi32>
    %180 = arith.cmpi eq, %74, %179 : vector<16x256xi32>
    %181 = vector.extract_strided_slice %1 {offsets = [1, 1, 0], sizes = [1, 1, 256], strides = [1, 1, 1]} : vector<9x8x256xf32> to vector<1x1x256xf32>
    %182 = vector.shape_cast %181 : vector<1x1x256xf32> to vector<256xf32>
    %183 = vector.shape_cast %182 : vector<256xf32> to vector<1x256xf32>
    %cst_36 = arith.constant 0.000000e+00 : f32
    %184 = vector.shape_cast %183 : vector<1x256xf32> to vector<1x256xf32>
    %185 = vector.broadcast %184 : vector<1x256xf32> to vector<16x256xf32>
    %186 = vector.broadcast %cst_36 : f32 to vector<16x256xf32>
    %187 = arith.select %180, %185, %186 : vector<16x256xi1>, vector<16x256xf32>
    %188 = arith.addf %178, %187 : vector<16x256xf32>
    %c2_i32_37 = arith.constant 2 : i32
    %189 = vector.broadcast %c2_i32_37 : i32 to vector<16x256xi32>
    %190 = arith.cmpi eq, %74, %189 : vector<16x256xi32>
    %191 = vector.extract_strided_slice %1 {offsets = [1, 2, 0], sizes = [1, 1, 256], strides = [1, 1, 1]} : vector<9x8x256xf32> to vector<1x1x256xf32>
    %192 = vector.shape_cast %191 : vector<1x1x256xf32> to vector<256xf32>
    %193 = vector.shape_cast %192 : vector<256xf32> to vector<1x256xf32>
    %cst_38 = arith.constant 0.000000e+00 : f32
    %194 = vector.shape_cast %193 : vector<1x256xf32> to vector<1x256xf32>
    %195 = vector.broadcast %194 : vector<1x256xf32> to vector<16x256xf32>
    %196 = vector.broadcast %cst_38 : f32 to vector<16x256xf32>
    %197 = arith.select %190, %195, %196 : vector<16x256xi1>, vector<16x256xf32>
    %198 = arith.addf %188, %197 : vector<16x256xf32>
    %c3_i32_39 = arith.constant 3 : i32
    %199 = vector.broadcast %c3_i32_39 : i32 to vector<16x256xi32>
    %200 = arith.cmpi eq, %74, %199 : vector<16x256xi32>
    %201 = vector.extract_strided_slice %1 {offsets = [1, 3, 0], sizes = [1, 1, 256], strides = [1, 1, 1]} : vector<9x8x256xf32> to vector<1x1x256xf32>
    %202 = vector.shape_cast %201 : vector<1x1x256xf32> to vector<256xf32>
    %203 = vector.shape_cast %202 : vector<256xf32> to vector<1x256xf32>
    %cst_40 = arith.constant 0.000000e+00 : f32
    %204 = vector.shape_cast %203 : vector<1x256xf32> to vector<1x256xf32>
    %205 = vector.broadcast %204 : vector<1x256xf32> to vector<16x256xf32>
    %206 = vector.broadcast %cst_40 : f32 to vector<16x256xf32>
    %207 = arith.select %200, %205, %206 : vector<16x256xi1>, vector<16x256xf32>
    %208 = arith.addf %198, %207 : vector<16x256xf32>
    %c4_i32_41 = arith.constant 4 : i32
    %209 = vector.broadcast %c4_i32_41 : i32 to vector<16x256xi32>
    %210 = arith.cmpi eq, %74, %209 : vector<16x256xi32>
    %211 = vector.extract_strided_slice %1 {offsets = [1, 4, 0], sizes = [1, 1, 256], strides = [1, 1, 1]} : vector<9x8x256xf32> to vector<1x1x256xf32>
    %212 = vector.shape_cast %211 : vector<1x1x256xf32> to vector<256xf32>
    %213 = vector.shape_cast %212 : vector<256xf32> to vector<1x256xf32>
    %cst_42 = arith.constant 0.000000e+00 : f32
    %214 = vector.shape_cast %213 : vector<1x256xf32> to vector<1x256xf32>
    %215 = vector.broadcast %214 : vector<1x256xf32> to vector<16x256xf32>
    %216 = vector.broadcast %cst_42 : f32 to vector<16x256xf32>
    %217 = arith.select %210, %215, %216 : vector<16x256xi1>, vector<16x256xf32>
    %218 = arith.addf %208, %217 : vector<16x256xf32>
    %c5_i32_43 = arith.constant 5 : i32
    %219 = vector.broadcast %c5_i32_43 : i32 to vector<16x256xi32>
    %220 = arith.cmpi eq, %74, %219 : vector<16x256xi32>
    %221 = vector.extract_strided_slice %1 {offsets = [1, 5, 0], sizes = [1, 1, 256], strides = [1, 1, 1]} : vector<9x8x256xf32> to vector<1x1x256xf32>
    %222 = vector.shape_cast %221 : vector<1x1x256xf32> to vector<256xf32>
    %223 = vector.shape_cast %222 : vector<256xf32> to vector<1x256xf32>
    %cst_44 = arith.constant 0.000000e+00 : f32
    %224 = vector.shape_cast %223 : vector<1x256xf32> to vector<1x256xf32>
    %225 = vector.broadcast %224 : vector<1x256xf32> to vector<16x256xf32>
    %226 = vector.broadcast %cst_44 : f32 to vector<16x256xf32>
    %227 = arith.select %220, %225, %226 : vector<16x256xi1>, vector<16x256xf32>
    %228 = arith.addf %218, %227 : vector<16x256xf32>
    %c6_i32_45 = arith.constant 6 : i32
    %229 = vector.broadcast %c6_i32_45 : i32 to vector<16x256xi32>
    %230 = arith.cmpi eq, %74, %229 : vector<16x256xi32>
    %231 = vector.extract_strided_slice %1 {offsets = [1, 6, 0], sizes = [1, 1, 256], strides = [1, 1, 1]} : vector<9x8x256xf32> to vector<1x1x256xf32>
    %232 = vector.shape_cast %231 : vector<1x1x256xf32> to vector<256xf32>
    %233 = vector.shape_cast %232 : vector<256xf32> to vector<1x256xf32>
    %cst_46 = arith.constant 0.000000e+00 : f32
    %234 = vector.shape_cast %233 : vector<1x256xf32> to vector<1x256xf32>
    %235 = vector.broadcast %234 : vector<1x256xf32> to vector<16x256xf32>
    %236 = vector.broadcast %cst_46 : f32 to vector<16x256xf32>
    %237 = arith.select %230, %235, %236 : vector<16x256xi1>, vector<16x256xf32>
    %238 = arith.addf %228, %237 : vector<16x256xf32>
    %c7_i32_47 = arith.constant 7 : i32
    %239 = vector.broadcast %c7_i32_47 : i32 to vector<16x256xi32>
    %240 = arith.cmpi eq, %74, %239 : vector<16x256xi32>
    %241 = vector.extract_strided_slice %1 {offsets = [1, 7, 0], sizes = [1, 1, 256], strides = [1, 1, 1]} : vector<9x8x256xf32> to vector<1x1x256xf32>
    %242 = vector.shape_cast %241 : vector<1x1x256xf32> to vector<256xf32>
    %243 = vector.shape_cast %242 : vector<256xf32> to vector<1x256xf32>
    %cst_48 = arith.constant 0.000000e+00 : f32
    %244 = vector.shape_cast %243 : vector<1x256xf32> to vector<1x256xf32>
    %245 = vector.broadcast %244 : vector<1x256xf32> to vector<16x256xf32>
    %246 = vector.broadcast %cst_48 : f32 to vector<16x256xf32>
    %247 = arith.select %240, %245, %246 : vector<16x256xi1>, vector<16x256xf32>
    %248 = arith.addf %238, %247 : vector<16x256xf32>
    %c0_49 = arith.constant 0 : index
    %c1 = arith.constant 1 : index
    %c0_50 = arith.constant 0 : index
    %c0_51 = arith.constant 0 : index
    %249 = vector.load %arg6[%c0_49, %c1, %c0_50, %c0_51] : memref<1x9x24x256xf32, #tpu.memory_space<vmem>>, vector<1x1x16x256xf32>
    %250 = vector.shape_cast %249 : vector<1x1x16x256xf32> to vector<16x256xf32>
    %251 = vector.shape_cast %248 : vector<16x256xf32> to vector<1x1x16x256xf32>
    tpu.vector_store %arg6[%c0_49, %c1, %c0_50, %c0_51], %251 {strides = array<i32>} : memref<1x9x24x256xf32, #tpu.memory_space<vmem>>, vector<1x1x16x256xf32>,
    %cst_52 = arith.constant 0.000000e+00 : f32
    %252 = vector.broadcast %cst_52 : f32 to vector<16x256xf32>
    %c0_i32_53 = arith.constant 0 : i32
    %253 = vector.broadcast %c0_i32_53 : i32 to vector<16x256xi32>
    %254 = arith.cmpi eq, %74, %253 : vector<16x256xi32>
    %255 = vector.extract_strided_slice %1 {offsets = [2, 0, 0], sizes = [1, 1, 256], strides = [1, 1, 1]} : vector<9x8x256xf32> to vector<1x1x256xf32>
    %256 = vector.shape_cast %255 : vector<1x1x256xf32> to vector<256xf32>
    %257 = vector.shape_cast %256 : vector<256xf32> to vector<1x256xf32>
    %cst_54 = arith.constant 0.000000e+00 : f32
    %258 = vector.shape_cast %257 : vector<1x256xf32> to vector<1x256xf32>
    %259 = vector.broadcast %258 : vector<1x256xf32> to vector<16x256xf32>
    %260 = vector.broadcast %cst_54 : f32 to vector<16x256xf32>
    %261 = arith.select %254, %259, %260 : vector<16x256xi1>, vector<16x256xf32>
    %262 = arith.addf %252, %261 : vector<16x256xf32>
    %c1_i32_55 = arith.constant 1 : i32
    %263 = vector.broadcast %c1_i32_55 : i32 to vector<16x256xi32>
    %264 = arith.cmpi eq, %74, %263 : vector<16x256xi32>
    %265 = vector.extract_strided_slice %1 {offsets = [2, 1, 0], sizes = [1, 1, 256], strides = [1, 1, 1]} : vector<9x8x256xf32> to vector<1x1x256xf32>
    %266 = vector.shape_cast %265 : vector<1x1x256xf32> to vector<256xf32>
    %267 = vector.shape_cast %266 : vector<256xf32> to vector<1x256xf32>
    %cst_56 = arith.constant 0.000000e+00 : f32
    %268 = vector.shape_cast %267 : vector<1x256xf32> to vector<1x256xf32>
    %269 = vector.broadcast %268 : vector<1x256xf32> to vector<16x256xf32>
    %270 = vector.broadcast %cst_56 : f32 to vector<16x256xf32>
    %271 = arith.select %264, %269, %270 : vector<16x256xi1>, vector<16x256xf32>
    %272 = arith.addf %262, %271 : vector<16x256xf32>
    %c2_i32_57 = arith.constant 2 : i32
    %273 = vector.broadcast %c2_i32_57 : i32 to vector<16x256xi32>
    %274 = arith.cmpi eq, %74, %273 : vector<16x256xi32>
    %275 = vector.extract_strided_slice %1 {offsets = [2, 2, 0], sizes = [1, 1, 256], strides = [1, 1, 1]} : vector<9x8x256xf32> to vector<1x1x256xf32>
    %276 = vector.shape_cast %275 : vector<1x1x256xf32> to vector<256xf32>
    %277 = vector.shape_cast %276 : vector<256xf32> to vector<1x256xf32>
    %cst_58 = arith.constant 0.000000e+00 : f32
    %278 = vector.shape_cast %277 : vector<1x256xf32> to vector<1x256xf32>
    %279 = vector.broadcast %278 : vector<1x256xf32> to vector<16x256xf32>
    %280 = vector.broadcast %cst_58 : f32 to vector<16x256xf32>
    %281 = arith.select %274, %279, %280 : vector<16x256xi1>, vector<16x256xf32>
    %282 = arith.addf %272, %281 : vector<16x256xf32>
    %c3_i32_59 = arith.constant 3 : i32
    %283 = vector.broadcast %c3_i32_59 : i32 to vector<16x256xi32>
    %284 = arith.cmpi eq, %74, %283 : vector<16x256xi32>
    %285 = vector.extract_strided_slice %1 {offsets = [2, 3, 0], sizes = [1, 1, 256], strides = [1, 1, 1]} : vector<9x8x256xf32> to vector<1x1x256xf32>
    %286 = vector.shape_cast %285 : vector<1x1x256xf32> to vector<256xf32>
    %287 = vector.shape_cast %286 : vector<256xf32> to vector<1x256xf32>
    %cst_60 = arith.constant 0.000000e+00 : f32
    %288 = vector.shape_cast %287 : vector<1x256xf32> to vector<1x256xf32>
    %289 = vector.broadcast %288 : vector<1x256xf32> to vector<16x256xf32>
    %290 = vector.broadcast %cst_60 : f32 to vector<16x256xf32>
    %291 = arith.select %284, %289, %290 : vector<16x256xi1>, vector<16x256xf32>
    %292 = arith.addf %282, %291 : vector<16x256xf32>
    %c4_i32_61 = arith.constant 4 : i32
    %293 = vector.broadcast %c4_i32_61 : i32 to vector<16x256xi32>
    %294 = arith.cmpi eq, %74, %293 : vector<16x256xi32>
    %295 = vector.extract_strided_slice %1 {offsets = [2, 4, 0], sizes = [1, 1, 256], strides = [1, 1, 1]} : vector<9x8x256xf32> to vector<1x1x256xf32>
    %296 = vector.shape_cast %295 : vector<1x1x256xf32> to vector<256xf32>
    %297 = vector.shape_cast %296 : vector<256xf32> to vector<1x256xf32>
    %cst_62 = arith.constant 0.000000e+00 : f32
    %298 = vector.shape_cast %297 : vector<1x256xf32> to vector<1x256xf32>
    %299 = vector.broadcast %298 : vector<1x256xf32> to vector<16x256xf32>
    %300 = vector.broadcast %cst_62 : f32 to vector<16x256xf32>
    %301 = arith.select %294, %299, %300 : vector<16x256xi1>, vector<16x256xf32>
    %302 = arith.addf %292, %301 : vector<16x256xf32>
    %c5_i32_63 = arith.constant 5 : i32
    %303 = vector.broadcast %c5_i32_63 : i32 to vector<16x256xi32>
    %304 = arith.cmpi eq, %74, %303 : vector<16x256xi32>
    %305 = vector.extract_strided_slice %1 {offsets = [2, 5, 0], sizes = [1, 1, 256], strides = [1, 1, 1]} : vector<9x8x256xf32> to vector<1x1x256xf32>
    %306 = vector.shape_cast %305 : vector<1x1x256xf32> to vector<256xf32>
    %307 = vector.shape_cast %306 : vector<256xf32> to vector<1x256xf32>
    %cst_64 = arith.constant 0.000000e+00 : f32
    %308 = vector.shape_cast %307 : vector<1x256xf32> to vector<1x256xf32>
    %309 = vector.broadcast %308 : vector<1x256xf32> to vector<16x256xf32>
    %310 = vector.broadcast %cst_64 : f32 to vector<16x256xf32>
    %311 = arith.select %304, %309, %310 : vector<16x256xi1>, vector<16x256xf32>
    %312 = arith.addf %302, %311 : vector<16x256xf32>
    %c6_i32_65 = arith.constant 6 : i32
    %313 = vector.broadcast %c6_i32_65 : i32 to vector<16x256xi32>
    %314 = arith.cmpi eq, %74, %313 : vector<16x256xi32>
    %315 = vector.extract_strided_slice %1 {offsets = [2, 6, 0], sizes = [1, 1, 256], strides = [1, 1, 1]} : vector<9x8x256xf32> to vector<1x1x256xf32>
    %316 = vector.shape_cast %315 : vector<1x1x256xf32> to vector<256xf32>
    %317 = vector.shape_cast %316 : vector<256xf32> to vector<1x256xf32>
    %cst_66 = arith.constant 0.000000e+00 : f32
    %318 = vector.shape_cast %317 : vector<1x256xf32> to vector<1x256xf32>
    %319 = vector.broadcast %318 : vector<1x256xf32> to vector<16x256xf32>
    %320 = vector.broadcast %cst_66 : f32 to vector<16x256xf32>
    %321 = arith.select %314, %319, %320 : vector<16x256xi1>, vector<16x256xf32>
    %322 = arith.addf %312, %321 : vector<16x256xf32>
    %c7_i32_67 = arith.constant 7 : i32
    %323 = vector.broadcast %c7_i32_67 : i32 to vector<16x256xi32>
    %324 = arith.cmpi eq, %74, %323 : vector<16x256xi32>
    %325 = vector.extract_strided_slice %1 {offsets = [2, 7, 0], sizes = [1, 1, 256], strides = [1, 1, 1]} : vector<9x8x256xf32> to vector<1x1x256xf32>
    %326 = vector.shape_cast %325 : vector<1x1x256xf32> to vector<256xf32>
    %327 = vector.shape_cast %326 : vector<256xf32> to vector<1x256xf32>
    %cst_68 = arith.constant 0.000000e+00 : f32
    %328 = vector.shape_cast %327 : vector<1x256xf32> to vector<1x256xf32>
    %329 = vector.broadcast %328 : vector<1x256xf32> to vector<16x256xf32>
    %330 = vector.broadcast %cst_68 : f32 to vector<16x256xf32>
    %331 = arith.select %324, %329, %330 : vector<16x256xi1>, vector<16x256xf32>
    %332 = arith.addf %322, %331 : vector<16x256xf32>
    %c0_69 = arith.constant 0 : index
    %c2 = arith.constant 2 : index
    %c0_70 = arith.constant 0 : index
    %c0_71 = arith.constant 0 : index
    %333 = vector.load %arg6[%c0_69, %c2, %c0_70, %c0_71] : memref<1x9x24x256xf32, #tpu.memory_space<vmem>>, vector<1x1x16x256xf32>
    %334 = vector.shape_cast %333 : vector<1x1x16x256xf32> to vector<16x256xf32>
    %335 = vector.shape_cast %332 : vector<16x256xf32> to vector<1x1x16x256xf32>
    tpu.vector_store %arg6[%c0_69, %c2, %c0_70, %c0_71], %335 {strides = array<i32>} : memref<1x9x24x256xf32, #tpu.memory_space<vmem>>, vector<1x1x16x256xf32>,
    %cst_72 = arith.constant 0.000000e+00 : f32
    %336 = vector.broadcast %cst_72 : f32 to vector<16x256xf32>
    %c0_i32_73 = arith.constant 0 : i32
    %337 = vector.broadcast %c0_i32_73 : i32 to vector<16x256xi32>
    %338 = arith.cmpi eq, %74, %337 : vector<16x256xi32>
    %339 = vector.extract_strided_slice %1 {offsets = [3, 0, 0], sizes = [1, 1, 256], strides = [1, 1, 1]} : vector<9x8x256xf32> to vector<1x1x256xf32>
    %340 = vector.shape_cast %339 : vector<1x1x256xf32> to vector<256xf32>
    %341 = vector.shape_cast %340 : vector<256xf32> to vector<1x256xf32>
    %cst_74 = arith.constant 0.000000e+00 : f32
    %342 = vector.shape_cast %341 : vector<1x256xf32> to vector<1x256xf32>
    %343 = vector.broadcast %342 : vector<1x256xf32> to vector<16x256xf32>
    %344 = vector.broadcast %cst_74 : f32 to vector<16x256xf32>
    %345 = arith.select %338, %343, %344 : vector<16x256xi1>, vector<16x256xf32>
    %346 = arith.addf %336, %345 : vector<16x256xf32>
    %c1_i32_75 = arith.constant 1 : i32
    %347 = vector.broadcast %c1_i32_75 : i32 to vector<16x256xi32>
    %348 = arith.cmpi eq, %74, %347 : vector<16x256xi32>
    %349 = vector.extract_strided_slice %1 {offsets = [3, 1, 0], sizes = [1, 1, 256], strides = [1, 1, 1]} : vector<9x8x256xf32> to vector<1x1x256xf32>
    %350 = vector.shape_cast %349 : vector<1x1x256xf32> to vector<256xf32>
    %351 = vector.shape_cast %350 : vector<256xf32> to vector<1x256xf32>
    %cst_76 = arith.constant 0.000000e+00 : f32
    %352 = vector.shape_cast %351 : vector<1x256xf32> to vector<1x256xf32>
    %353 = vector.broadcast %352 : vector<1x256xf32> to vector<16x256xf32>
    %354 = vector.broadcast %cst_76 : f32 to vector<16x256xf32>
    %355 = arith.select %348, %353, %354 : vector<16x256xi1>, vector<16x256xf32>
    %356 = arith.addf %346, %355 : vector<16x256xf32>
    %c2_i32_77 = arith.constant 2 : i32
    %357 = vector.broadcast %c2_i32_77 : i32 to vector<16x256xi32>
    %358 = arith.cmpi eq, %74, %357 : vector<16x256xi32>
    %359 = vector.extract_strided_slice %1 {offsets = [3, 2, 0], sizes = [1, 1, 256], strides = [1, 1, 1]} : vector<9x8x256xf32> to vector<1x1x256xf32>
    %360 = vector.shape_cast %359 : vector<1x1x256xf32> to vector<256xf32>
    %361 = vector.shape_cast %360 : vector<256xf32> to vector<1x256xf32>
    %cst_78 = arith.constant 0.000000e+00 : f32
    %362 = vector.shape_cast %361 : vector<1x256xf32> to vector<1x256xf32>
    %363 = vector.broadcast %362 : vector<1x256xf32> to vector<16x256xf32>
    %364 = vector.broadcast %cst_78 : f32 to vector<16x256xf32>
    %365 = arith.select %358, %363, %364 : vector<16x256xi1>, vector<16x256xf32>
    %366 = arith.addf %356, %365 : vector<16x256xf32>
    %c3_i32_79 = arith.constant 3 : i32
    %367 = vector.broadcast %c3_i32_79 : i32 to vector<16x256xi32>
    %368 = arith.cmpi eq, %74, %367 : vector<16x256xi32>
    %369 = vector.extract_strided_slice %1 {offsets = [3, 3, 0], sizes = [1, 1, 256], strides = [1, 1, 1]} : vector<9x8x256xf32> to vector<1x1x256xf32>
    %370 = vector.shape_cast %369 : vector<1x1x256xf32> to vector<256xf32>
    %371 = vector.shape_cast %370 : vector<256xf32> to vector<1x256xf32>
    %cst_80 = arith.constant 0.000000e+00 : f32
    %372 = vector.shape_cast %371 : vector<1x256xf32> to vector<1x256xf32>
    %373 = vector.broadcast %372 : vector<1x256xf32> to vector<16x256xf32>
    %374 = vector.broadcast %cst_80 : f32 to vector<16x256xf32>
    %375 = arith.select %368, %373, %374 : vector<16x256xi1>, vector<16x256xf32>
    %376 = arith.addf %366, %375 : vector<16x256xf32>
    %c4_i32_81 = arith.constant 4 : i32
    %377 = vector.broadcast %c4_i32_81 : i32 to vector<16x256xi32>
    %378 = arith.cmpi eq, %74, %377 : vector<16x256xi32>
    %379 = vector.extract_strided_slice %1 {offsets = [3, 4, 0], sizes = [1, 1, 256], strides = [1, 1, 1]} : vector<9x8x256xf32> to vector<1x1x256xf32>
    %380 = vector.shape_cast %379 : vector<1x1x256xf32> to vector<256xf32>
    %381 = vector.shape_cast %380 : vector<256xf32> to vector<1x256xf32>
    %cst_82 = arith.constant 0.000000e+00 : f32
    %382 = vector.shape_cast %381 : vector<1x256xf32> to vector<1x256xf32>
    %383 = vector.broadcast %382 : vector<1x256xf32> to vector<16x256xf32>
    %384 = vector.broadcast %cst_82 : f32 to vector<16x256xf32>
    %385 = arith.select %378, %383, %384 : vector<16x256xi1>, vector<16x256xf32>
    %386 = arith.addf %376, %385 : vector<16x256xf32>
    %c5_i32_83 = arith.constant 5 : i32
    %387 = vector.broadcast %c5_i32_83 : i32 to vector<16x256xi32>
    %388 = arith.cmpi eq, %74, %387 : vector<16x256xi32>
    %389 = vector.extract_strided_slice %1 {offsets = [3, 5, 0], sizes = [1, 1, 256], strides = [1, 1, 1]} : vector<9x8x256xf32> to vector<1x1x256xf32>
    %390 = vector.shape_cast %389 : vector<1x1x256xf32> to vector<256xf32>
    %391 = vector.shape_cast %390 : vector<256xf32> to vector<1x256xf32>
    %cst_84 = arith.constant 0.000000e+00 : f32
    %392 = vector.shape_cast %391 : vector<1x256xf32> to vector<1x256xf32>
    %393 = vector.broadcast %392 : vector<1x256xf32> to vector<16x256xf32>
    %394 = vector.broadcast %cst_84 : f32 to vector<16x256xf32>
    %395 = arith.select %388, %393, %394 : vector<16x256xi1>, vector<16x256xf32>
    %396 = arith.addf %386, %395 : vector<16x256xf32>
    %c6_i32_85 = arith.constant 6 : i32
    %397 = vector.broadcast %c6_i32_85 : i32 to vector<16x256xi32>
    %398 = arith.cmpi eq, %74, %397 : vector<16x256xi32>
    %399 = vector.extract_strided_slice %1 {offsets = [3, 6, 0], sizes = [1, 1, 256], strides = [1, 1, 1]} : vector<9x8x256xf32> to vector<1x1x256xf32>
    %400 = vector.shape_cast %399 : vector<1x1x256xf32> to vector<256xf32>
    %401 = vector.shape_cast %400 : vector<256xf32> to vector<1x256xf32>
    %cst_86 = arith.constant 0.000000e+00 : f32
    %402 = vector.shape_cast %401 : vector<1x256xf32> to vector<1x256xf32>
    %403 = vector.broadcast %402 : vector<1x256xf32> to vector<16x256xf32>
    %404 = vector.broadcast %cst_86 : f32 to vector<16x256xf32>
    %405 = arith.select %398, %403, %404 : vector<16x256xi1>, vector<16x256xf32>
    %406 = arith.addf %396, %405 : vector<16x256xf32>
    %c7_i32_87 = arith.constant 7 : i32
    %407 = vector.broadcast %c7_i32_87 : i32 to vector<16x256xi32>
    %408 = arith.cmpi eq, %74, %407 : vector<16x256xi32>
    %409 = vector.extract_strided_slice %1 {offsets = [3, 7, 0], sizes = [1, 1, 256], strides = [1, 1, 1]} : vector<9x8x256xf32> to vector<1x1x256xf32>
    %410 = vector.shape_cast %409 : vector<1x1x256xf32> to vector<256xf32>
    %411 = vector.shape_cast %410 : vector<256xf32> to vector<1x256xf32>
    %cst_88 = arith.constant 0.000000e+00 : f32
    %412 = vector.shape_cast %411 : vector<1x256xf32> to vector<1x256xf32>
    %413 = vector.broadcast %412 : vector<1x256xf32> to vector<16x256xf32>
    %414 = vector.broadcast %cst_88 : f32 to vector<16x256xf32>
    %415 = arith.select %408, %413, %414 : vector<16x256xi1>, vector<16x256xf32>
    %416 = arith.addf %406, %415 : vector<16x256xf32>
    %c0_89 = arith.constant 0 : index
    %c3 = arith.constant 3 : index
    %c0_90 = arith.constant 0 : index
    %c0_91 = arith.constant 0 : index
    %417 = vector.load %arg6[%c0_89, %c3, %c0_90, %c0_91] : memref<1x9x24x256xf32, #tpu.memory_space<vmem>>, vector<1x1x16x256xf32>
    %418 = vector.shape_cast %417 : vector<1x1x16x256xf32> to vector<16x256xf32>
    %419 = vector.shape_cast %416 : vector<16x256xf32> to vector<1x1x16x256xf32>
    tpu.vector_store %arg6[%c0_89, %c3, %c0_90, %c0_91], %419 {strides = array<i32>} : memref<1x9x24x256xf32, #tpu.memory_space<vmem>>, vector<1x1x16x256xf32>,
    %cst_92 = arith.constant 0.000000e+00 : f32
    %420 = vector.broadcast %cst_92 : f32 to vector<16x256xf32>
    %c0_i32_93 = arith.constant 0 : i32
    %421 = vector.broadcast %c0_i32_93 : i32 to vector<16x256xi32>
    %422 = arith.cmpi eq, %74, %421 : vector<16x256xi32>
    %423 = vector.extract_strided_slice %1 {offsets = [4, 0, 0], sizes = [1, 1, 256], strides = [1, 1, 1]} : vector<9x8x256xf32> to vector<1x1x256xf32>
    %424 = vector.shape_cast %423 : vector<1x1x256xf32> to vector<256xf32>
    %425 = vector.shape_cast %424 : vector<256xf32> to vector<1x256xf32>
    %cst_94 = arith.constant 0.000000e+00 : f32
    %426 = vector.shape_cast %425 : vector<1x256xf32> to vector<1x256xf32>
    %427 = vector.broadcast %426 : vector<1x256xf32> to vector<16x256xf32>
    %428 = vector.broadcast %cst_94 : f32 to vector<16x256xf32>
    %429 = arith.select %422, %427, %428 : vector<16x256xi1>, vector<16x256xf32>
    %430 = arith.addf %420, %429 : vector<16x256xf32>
    %c1_i32_95 = arith.constant 1 : i32
    %431 = vector.broadcast %c1_i32_95 : i32 to vector<16x256xi32>
    %432 = arith.cmpi eq, %74, %431 : vector<16x256xi32>
    %433 = vector.extract_strided_slice %1 {offsets = [4, 1, 0], sizes = [1, 1, 256], strides = [1, 1, 1]} : vector<9x8x256xf32> to vector<1x1x256xf32>
    %434 = vector.shape_cast %433 : vector<1x1x256xf32> to vector<256xf32>
    %435 = vector.shape_cast %434 : vector<256xf32> to vector<1x256xf32>
    %cst_96 = arith.constant 0.000000e+00 : f32
    %436 = vector.shape_cast %435 : vector<1x256xf32> to vector<1x256xf32>
    %437 = vector.broadcast %436 : vector<1x256xf32> to vector<16x256xf32>
    %438 = vector.broadcast %cst_96 : f32 to vector<16x256xf32>
    %439 = arith.select %432, %437, %438 : vector<16x256xi1>, vector<16x256xf32>
    %440 = arith.addf %430, %439 : vector<16x256xf32>
    %c2_i32_97 = arith.constant 2 : i32
    %441 = vector.broadcast %c2_i32_97 : i32 to vector<16x256xi32>
    %442 = arith.cmpi eq, %74, %441 : vector<16x256xi32>
    %443 = vector.extract_strided_slice %1 {offsets = [4, 2, 0], sizes = [1, 1, 256], strides = [1, 1, 1]} : vector<9x8x256xf32> to vector<1x1x256xf32>
    %444 = vector.shape_cast %443 : vector<1x1x256xf32> to vector<256xf32>
    %445 = vector.shape_cast %444 : vector<256xf32> to vector<1x256xf32>
    %cst_98 = arith.constant 0.000000e+00 : f32
    %446 = vector.shape_cast %445 : vector<1x256xf32> to vector<1x256xf32>
    %447 = vector.broadcast %446 : vector<1x256xf32> to vector<16x256xf32>
    %448 = vector.broadcast %cst_98 : f32 to vector<16x256xf32>
    %449 = arith.select %442, %447, %448 : vector<16x256xi1>, vector<16x256xf32>
    %450 = arith.addf %440, %449 : vector<16x256xf32>
    %c3_i32_99 = arith.constant 3 : i32
    %451 = vector.broadcast %c3_i32_99 : i32 to vector<16x256xi32>
    %452 = arith.cmpi eq, %74, %451 : vector<16x256xi32>
    %453 = vector.extract_strided_slice %1 {offsets = [4, 3, 0], sizes = [1, 1, 256], strides = [1, 1, 1]} : vector<9x8x256xf32> to vector<1x1x256xf32>
    %454 = vector.shape_cast %453 : vector<1x1x256xf32> to vector<256xf32>
    %455 = vector.shape_cast %454 : vector<256xf32> to vector<1x256xf32>
    %cst_100 = arith.constant 0.000000e+00 : f32
    %456 = vector.shape_cast %455 : vector<1x256xf32> to vector<1x256xf32>
    %457 = vector.broadcast %456 : vector<1x256xf32> to vector<16x256xf32>
    %458 = vector.broadcast %cst_100 : f32 to vector<16x256xf32>
    %459 = arith.select %452, %457, %458 : vector<16x256xi1>, vector<16x256xf32>
    %460 = arith.addf %450, %459 : vector<16x256xf32>
    %c4_i32_101 = arith.constant 4 : i32
    %461 = vector.broadcast %c4_i32_101 : i32 to vector<16x256xi32>
    %462 = arith.cmpi eq, %74, %461 : vector<16x256xi32>
    %463 = vector.extract_strided_slice %1 {offsets = [4, 4, 0], sizes = [1, 1, 256], strides = [1, 1, 1]} : vector<9x8x256xf32> to vector<1x1x256xf32>
    %464 = vector.shape_cast %463 : vector<1x1x256xf32> to vector<256xf32>
    %465 = vector.shape_cast %464 : vector<256xf32> to vector<1x256xf32>
    %cst_102 = arith.constant 0.000000e+00 : f32
    %466 = vector.shape_cast %465 : vector<1x256xf32> to vector<1x256xf32>
    %467 = vector.broadcast %466 : vector<1x256xf32> to vector<16x256xf32>
    %468 = vector.broadcast %cst_102 : f32 to vector<16x256xf32>
    %469 = arith.select %462, %467, %468 : vector<16x256xi1>, vector<16x256xf32>
    %470 = arith.addf %460, %469 : vector<16x256xf32>
    %c5_i32_103 = arith.constant 5 : i32
    %471 = vector.broadcast %c5_i32_103 : i32 to vector<16x256xi32>
    %472 = arith.cmpi eq, %74, %471 : vector<16x256xi32>
    %473 = vector.extract_strided_slice %1 {offsets = [4, 5, 0], sizes = [1, 1, 256], strides = [1, 1, 1]} : vector<9x8x256xf32> to vector<1x1x256xf32>
    %474 = vector.shape_cast %473 : vector<1x1x256xf32> to vector<256xf32>
    %475 = vector.shape_cast %474 : vector<256xf32> to vector<1x256xf32>
    %cst_104 = arith.constant 0.000000e+00 : f32
    %476 = vector.shape_cast %475 : vector<1x256xf32> to vector<1x256xf32>
    %477 = vector.broadcast %476 : vector<1x256xf32> to vector<16x256xf32>
    %478 = vector.broadcast %cst_104 : f32 to vector<16x256xf32>
    %479 = arith.select %472, %477, %478 : vector<16x256xi1>, vector<16x256xf32>
    %480 = arith.addf %470, %479 : vector<16x256xf32>
    %c6_i32_105 = arith.constant 6 : i32
    %481 = vector.broadcast %c6_i32_105 : i32 to vector<16x256xi32>
    %482 = arith.cmpi eq, %74, %481 : vector<16x256xi32>
    %483 = vector.extract_strided_slice %1 {offsets = [4, 6, 0], sizes = [1, 1, 256], strides = [1, 1, 1]} : vector<9x8x256xf32> to vector<1x1x256xf32>
    %484 = vector.shape_cast %483 : vector<1x1x256xf32> to vector<256xf32>
    %485 = vector.shape_cast %484 : vector<256xf32> to vector<1x256xf32>
    %cst_106 = arith.constant 0.000000e+00 : f32
    %486 = vector.shape_cast %485 : vector<1x256xf32> to vector<1x256xf32>
    %487 = vector.broadcast %486 : vector<1x256xf32> to vector<16x256xf32>
    %488 = vector.broadcast %cst_106 : f32 to vector<16x256xf32>
    %489 = arith.select %482, %487, %488 : vector<16x256xi1>, vector<16x256xf32>
    %490 = arith.addf %480, %489 : vector<16x256xf32>
    %c7_i32_107 = arith.constant 7 : i32
    %491 = vector.broadcast %c7_i32_107 : i32 to vector<16x256xi32>
    %492 = arith.cmpi eq, %74, %491 : vector<16x256xi32>
    %493 = vector.extract_strided_slice %1 {offsets = [4, 7, 0], sizes = [1, 1, 256], strides = [1, 1, 1]} : vector<9x8x256xf32> to vector<1x1x256xf32>
    %494 = vector.shape_cast %493 : vector<1x1x256xf32> to vector<256xf32>
    %495 = vector.shape_cast %494 : vector<256xf32> to vector<1x256xf32>
    %cst_108 = arith.constant 0.000000e+00 : f32
    %496 = vector.shape_cast %495 : vector<1x256xf32> to vector<1x256xf32>
    %497 = vector.broadcast %496 : vector<1x256xf32> to vector<16x256xf32>
    %498 = vector.broadcast %cst_108 : f32 to vector<16x256xf32>
    %499 = arith.select %492, %497, %498 : vector<16x256xi1>, vector<16x256xf32>
    %500 = arith.addf %490, %499 : vector<16x256xf32>
    %c0_109 = arith.constant 0 : index
    %c4 = arith.constant 4 : index
    %c0_110 = arith.constant 0 : index
    %c0_111 = arith.constant 0 : index
    %501 = vector.load %arg6[%c0_109, %c4, %c0_110, %c0_111] : memref<1x9x24x256xf32, #tpu.memory_space<vmem>>, vector<1x1x16x256xf32>
    %502 = vector.shape_cast %501 : vector<1x1x16x256xf32> to vector<16x256xf32>
    %503 = vector.shape_cast %500 : vector<16x256xf32> to vector<1x1x16x256xf32>
    tpu.vector_store %arg6[%c0_109, %c4, %c0_110, %c0_111], %503 {strides = array<i32>} : memref<1x9x24x256xf32, #tpu.memory_space<vmem>>, vector<1x1x16x256xf32>,
    %cst_112 = arith.constant 0.000000e+00 : f32
    %504 = vector.broadcast %cst_112 : f32 to vector<16x256xf32>
    %c0_i32_113 = arith.constant 0 : i32
    %505 = vector.broadcast %c0_i32_113 : i32 to vector<16x256xi32>
    %506 = arith.cmpi eq, %74, %505 : vector<16x256xi32>
    %507 = vector.extract_strided_slice %1 {offsets = [5, 0, 0], sizes = [1, 1, 256], strides = [1, 1, 1]} : vector<9x8x256xf32> to vector<1x1x256xf32>
    %508 = vector.shape_cast %507 : vector<1x1x256xf32> to vector<256xf32>
    %509 = vector.shape_cast %508 : vector<256xf32> to vector<1x256xf32>
    %cst_114 = arith.constant 0.000000e+00 : f32
    %510 = vector.shape_cast %509 : vector<1x256xf32> to vector<1x256xf32>
    %511 = vector.broadcast %510 : vector<1x256xf32> to vector<16x256xf32>
    %512 = vector.broadcast %cst_114 : f32 to vector<16x256xf32>
    %513 = arith.select %506, %511, %512 : vector<16x256xi1>, vector<16x256xf32>
    %514 = arith.addf %504, %513 : vector<16x256xf32>
    %c1_i32_115 = arith.constant 1 : i32
    %515 = vector.broadcast %c1_i32_115 : i32 to vector<16x256xi32>
    %516 = arith.cmpi eq, %74, %515 : vector<16x256xi32>
    %517 = vector.extract_strided_slice %1 {offsets = [5, 1, 0], sizes = [1, 1, 256], strides = [1, 1, 1]} : vector<9x8x256xf32> to vector<1x1x256xf32>
    %518 = vector.shape_cast %517 : vector<1x1x256xf32> to vector<256xf32>
    %519 = vector.shape_cast %518 : vector<256xf32> to vector<1x256xf32>
    %cst_116 = arith.constant 0.000000e+00 : f32
    %520 = vector.shape_cast %519 : vector<1x256xf32> to vector<1x256xf32>
    %521 = vector.broadcast %520 : vector<1x256xf32> to vector<16x256xf32>
    %522 = vector.broadcast %cst_116 : f32 to vector<16x256xf32>
    %523 = arith.select %516, %521, %522 : vector<16x256xi1>, vector<16x256xf32>
    %524 = arith.addf %514, %523 : vector<16x256xf32>
    %c2_i32_117 = arith.constant 2 : i32
    %525 = vector.broadcast %c2_i32_117 : i32 to vector<16x256xi32>
    %526 = arith.cmpi eq, %74, %525 : vector<16x256xi32>
    %527 = vector.extract_strided_slice %1 {offsets = [5, 2, 0], sizes = [1, 1, 256], strides = [1, 1, 1]} : vector<9x8x256xf32> to vector<1x1x256xf32>
    %528 = vector.shape_cast %527 : vector<1x1x256xf32> to vector<256xf32>
    %529 = vector.shape_cast %528 : vector<256xf32> to vector<1x256xf32>
    %cst_118 = arith.constant 0.000000e+00 : f32
    %530 = vector.shape_cast %529 : vector<1x256xf32> to vector<1x256xf32>
    %531 = vector.broadcast %530 : vector<1x256xf32> to vector<16x256xf32>
    %532 = vector.broadcast %cst_118 : f32 to vector<16x256xf32>
    %533 = arith.select %526, %531, %532 : vector<16x256xi1>, vector<16x256xf32>
    %534 = arith.addf %524, %533 : vector<16x256xf32>
    %c3_i32_119 = arith.constant 3 : i32
    %535 = vector.broadcast %c3_i32_119 : i32 to vector<16x256xi32>
    %536 = arith.cmpi eq, %74, %535 : vector<16x256xi32>
    %537 = vector.extract_strided_slice %1 {offsets = [5, 3, 0], sizes = [1, 1, 256], strides = [1, 1, 1]} : vector<9x8x256xf32> to vector<1x1x256xf32>
    %538 = vector.shape_cast %537 : vector<1x1x256xf32> to vector<256xf32>
    %539 = vector.shape_cast %538 : vector<256xf32> to vector<1x256xf32>
    %cst_120 = arith.constant 0.000000e+00 : f32
    %540 = vector.shape_cast %539 : vector<1x256xf32> to vector<1x256xf32>
    %541 = vector.broadcast %540 : vector<1x256xf32> to vector<16x256xf32>
    %542 = vector.broadcast %cst_120 : f32 to vector<16x256xf32>
    %543 = arith.select %536, %541, %542 : vector<16x256xi1>, vector<16x256xf32>
    %544 = arith.addf %534, %543 : vector<16x256xf32>
    %c4_i32_121 = arith.constant 4 : i32
    %545 = vector.broadcast %c4_i32_121 : i32 to vector<16x256xi32>
    %546 = arith.cmpi eq, %74, %545 : vector<16x256xi32>
    %547 = vector.extract_strided_slice %1 {offsets = [5, 4, 0], sizes = [1, 1, 256], strides = [1, 1, 1]} : vector<9x8x256xf32> to vector<1x1x256xf32>
    %548 = vector.shape_cast %547 : vector<1x1x256xf32> to vector<256xf32>
    %549 = vector.shape_cast %548 : vector<256xf32> to vector<1x256xf32>
    %cst_122 = arith.constant 0.000000e+00 : f32
    %550 = vector.shape_cast %549 : vector<1x256xf32> to vector<1x256xf32>
    %551 = vector.broadcast %550 : vector<1x256xf32> to vector<16x256xf32>
    %552 = vector.broadcast %cst_122 : f32 to vector<16x256xf32>
    %553 = arith.select %546, %551, %552 : vector<16x256xi1>, vector<16x256xf32>
    %554 = arith.addf %544, %553 : vector<16x256xf32>
    %c5_i32_123 = arith.constant 5 : i32
    %555 = vector.broadcast %c5_i32_123 : i32 to vector<16x256xi32>
    %556 = arith.cmpi eq, %74, %555 : vector<16x256xi32>
    %557 = vector.extract_strided_slice %1 {offsets = [5, 5, 0], sizes = [1, 1, 256], strides = [1, 1, 1]} : vector<9x8x256xf32> to vector<1x1x256xf32>
    %558 = vector.shape_cast %557 : vector<1x1x256xf32> to vector<256xf32>
    %559 = vector.shape_cast %558 : vector<256xf32> to vector<1x256xf32>
    %cst_124 = arith.constant 0.000000e+00 : f32
    %560 = vector.shape_cast %559 : vector<1x256xf32> to vector<1x256xf32>
    %561 = vector.broadcast %560 : vector<1x256xf32> to vector<16x256xf32>
    %562 = vector.broadcast %cst_124 : f32 to vector<16x256xf32>
    %563 = arith.select %556, %561, %562 : vector<16x256xi1>, vector<16x256xf32>
    %564 = arith.addf %554, %563 : vector<16x256xf32>
    %c6_i32_125 = arith.constant 6 : i32
    %565 = vector.broadcast %c6_i32_125 : i32 to vector<16x256xi32>
    %566 = arith.cmpi eq, %74, %565 : vector<16x256xi32>
    %567 = vector.extract_strided_slice %1 {offsets = [5, 6, 0], sizes = [1, 1, 256], strides = [1, 1, 1]} : vector<9x8x256xf32> to vector<1x1x256xf32>
    %568 = vector.shape_cast %567 : vector<1x1x256xf32> to vector<256xf32>
    %569 = vector.shape_cast %568 : vector<256xf32> to vector<1x256xf32>
    %cst_126 = arith.constant 0.000000e+00 : f32
    %570 = vector.shape_cast %569 : vector<1x256xf32> to vector<1x256xf32>
    %571 = vector.broadcast %570 : vector<1x256xf32> to vector<16x256xf32>
    %572 = vector.broadcast %cst_126 : f32 to vector<16x256xf32>
    %573 = arith.select %566, %571, %572 : vector<16x256xi1>, vector<16x256xf32>
    %574 = arith.addf %564, %573 : vector<16x256xf32>
    %c7_i32_127 = arith.constant 7 : i32
    %575 = vector.broadcast %c7_i32_127 : i32 to vector<16x256xi32>
    %576 = arith.cmpi eq, %74, %575 : vector<16x256xi32>
    %577 = vector.extract_strided_slice %1 {offsets = [5, 7, 0], sizes = [1, 1, 256], strides = [1, 1, 1]} : vector<9x8x256xf32> to vector<1x1x256xf32>
    %578 = vector.shape_cast %577 : vector<1x1x256xf32> to vector<256xf32>
    %579 = vector.shape_cast %578 : vector<256xf32> to vector<1x256xf32>
    %cst_128 = arith.constant 0.000000e+00 : f32
    %580 = vector.shape_cast %579 : vector<1x256xf32> to vector<1x256xf32>
    %581 = vector.broadcast %580 : vector<1x256xf32> to vector<16x256xf32>
    %582 = vector.broadcast %cst_128 : f32 to vector<16x256xf32>
    %583 = arith.select %576, %581, %582 : vector<16x256xi1>, vector<16x256xf32>
    %584 = arith.addf %574, %583 : vector<16x256xf32>
    %c0_129 = arith.constant 0 : index
    %c5 = arith.constant 5 : index
    %c0_130 = arith.constant 0 : index
    %c0_131 = arith.constant 0 : index
    %585 = vector.load %arg6[%c0_129, %c5, %c0_130, %c0_131] : memref<1x9x24x256xf32, #tpu.memory_space<vmem>>, vector<1x1x16x256xf32>
    %586 = vector.shape_cast %585 : vector<1x1x16x256xf32> to vector<16x256xf32>
    %587 = vector.shape_cast %584 : vector<16x256xf32> to vector<1x1x16x256xf32>
    tpu.vector_store %arg6[%c0_129, %c5, %c0_130, %c0_131], %587 {strides = array<i32>} : memref<1x9x24x256xf32, #tpu.memory_space<vmem>>, vector<1x1x16x256xf32>,
    %cst_132 = arith.constant 0.000000e+00 : f32
    %588 = vector.broadcast %cst_132 : f32 to vector<16x256xf32>
    %c0_i32_133 = arith.constant 0 : i32
    %589 = vector.broadcast %c0_i32_133 : i32 to vector<16x256xi32>
    %590 = arith.cmpi eq, %74, %589 : vector<16x256xi32>
    %591 = vector.extract_strided_slice %1 {offsets = [6, 0, 0], sizes = [1, 1, 256], strides = [1, 1, 1]} : vector<9x8x256xf32> to vector<1x1x256xf32>
    %592 = vector.shape_cast %591 : vector<1x1x256xf32> to vector<256xf32>
    %593 = vector.shape_cast %592 : vector<256xf32> to vector<1x256xf32>
    %cst_134 = arith.constant 0.000000e+00 : f32
    %594 = vector.shape_cast %593 : vector<1x256xf32> to vector<1x256xf32>
    %595 = vector.broadcast %594 : vector<1x256xf32> to vector<16x256xf32>
    %596 = vector.broadcast %cst_134 : f32 to vector<16x256xf32>
    %597 = arith.select %590, %595, %596 : vector<16x256xi1>, vector<16x256xf32>
    %598 = arith.addf %588, %597 : vector<16x256xf32>
    %c1_i32_135 = arith.constant 1 : i32
    %599 = vector.broadcast %c1_i32_135 : i32 to vector<16x256xi32>
    %600 = arith.cmpi eq, %74, %599 : vector<16x256xi32>
    %601 = vector.extract_strided_slice %1 {offsets = [6, 1, 0], sizes = [1, 1, 256], strides = [1, 1, 1]} : vector<9x8x256xf32> to vector<1x1x256xf32>
    %602 = vector.shape_cast %601 : vector<1x1x256xf32> to vector<256xf32>
    %603 = vector.shape_cast %602 : vector<256xf32> to vector<1x256xf32>
    %cst_136 = arith.constant 0.000000e+00 : f32
    %604 = vector.shape_cast %603 : vector<1x256xf32> to vector<1x256xf32>
    %605 = vector.broadcast %604 : vector<1x256xf32> to vector<16x256xf32>
    %606 = vector.broadcast %cst_136 : f32 to vector<16x256xf32>
    %607 = arith.select %600, %605, %606 : vector<16x256xi1>, vector<16x256xf32>
    %608 = arith.addf %598, %607 : vector<16x256xf32>
    %c2_i32_137 = arith.constant 2 : i32
    %609 = vector.broadcast %c2_i32_137 : i32 to vector<16x256xi32>
    %610 = arith.cmpi eq, %74, %609 : vector<16x256xi32>
    %611 = vector.extract_strided_slice %1 {offsets = [6, 2, 0], sizes = [1, 1, 256], strides = [1, 1, 1]} : vector<9x8x256xf32> to vector<1x1x256xf32>
    %612 = vector.shape_cast %611 : vector<1x1x256xf32> to vector<256xf32>
    %613 = vector.shape_cast %612 : vector<256xf32> to vector<1x256xf32>
    %cst_138 = arith.constant 0.000000e+00 : f32
    %614 = vector.shape_cast %613 : vector<1x256xf32> to vector<1x256xf32>
    %615 = vector.broadcast %614 : vector<1x256xf32> to vector<16x256xf32>
    %616 = vector.broadcast %cst_138 : f32 to vector<16x256xf32>
    %617 = arith.select %610, %615, %616 : vector<16x256xi1>, vector<16x256xf32>
    %618 = arith.addf %608, %617 : vector<16x256xf32>
    %c3_i32_139 = arith.constant 3 : i32
    %619 = vector.broadcast %c3_i32_139 : i32 to vector<16x256xi32>
    %620 = arith.cmpi eq, %74, %619 : vector<16x256xi32>
    %621 = vector.extract_strided_slice %1 {offsets = [6, 3, 0], sizes = [1, 1, 256], strides = [1, 1, 1]} : vector<9x8x256xf32> to vector<1x1x256xf32>
    %622 = vector.shape_cast %621 : vector<1x1x256xf32> to vector<256xf32>
    %623 = vector.shape_cast %622 : vector<256xf32> to vector<1x256xf32>
    %cst_140 = arith.constant 0.000000e+00 : f32
    %624 = vector.shape_cast %623 : vector<1x256xf32> to vector<1x256xf32>
    %625 = vector.broadcast %624 : vector<1x256xf32> to vector<16x256xf32>
    %626 = vector.broadcast %cst_140 : f32 to vector<16x256xf32>
    %627 = arith.select %620, %625, %626 : vector<16x256xi1>, vector<16x256xf32>
    %628 = arith.addf %618, %627 : vector<16x256xf32>
    %c4_i32_141 = arith.constant 4 : i32
    %629 = vector.broadcast %c4_i32_141 : i32 to vector<16x256xi32>
    %630 = arith.cmpi eq, %74, %629 : vector<16x256xi32>
    %631 = vector.extract_strided_slice %1 {offsets = [6, 4, 0], sizes = [1, 1, 256], strides = [1, 1, 1]} : vector<9x8x256xf32> to vector<1x1x256xf32>
    %632 = vector.shape_cast %631 : vector<1x1x256xf32> to vector<256xf32>
    %633 = vector.shape_cast %632 : vector<256xf32> to vector<1x256xf32>
    %cst_142 = arith.constant 0.000000e+00 : f32
    %634 = vector.shape_cast %633 : vector<1x256xf32> to vector<1x256xf32>
    %635 = vector.broadcast %634 : vector<1x256xf32> to vector<16x256xf32>
    %636 = vector.broadcast %cst_142 : f32 to vector<16x256xf32>
    %637 = arith.select %630, %635, %636 : vector<16x256xi1>, vector<16x256xf32>
    %638 = arith.addf %628, %637 : vector<16x256xf32>
    %c5_i32_143 = arith.constant 5 : i32
    %639 = vector.broadcast %c5_i32_143 : i32 to vector<16x256xi32>
    %640 = arith.cmpi eq, %74, %639 : vector<16x256xi32>
    %641 = vector.extract_strided_slice %1 {offsets = [6, 5, 0], sizes = [1, 1, 256], strides = [1, 1, 1]} : vector<9x8x256xf32> to vector<1x1x256xf32>
    %642 = vector.shape_cast %641 : vector<1x1x256xf32> to vector<256xf32>
    %643 = vector.shape_cast %642 : vector<256xf32> to vector<1x256xf32>
    %cst_144 = arith.constant 0.000000e+00 : f32
    %644 = vector.shape_cast %643 : vector<1x256xf32> to vector<1x256xf32>
    %645 = vector.broadcast %644 : vector<1x256xf32> to vector<16x256xf32>
    %646 = vector.broadcast %cst_144 : f32 to vector<16x256xf32>
    %647 = arith.select %640, %645, %646 : vector<16x256xi1>, vector<16x256xf32>
    %648 = arith.addf %638, %647 : vector<16x256xf32>
    %c6_i32_145 = arith.constant 6 : i32
    %649 = vector.broadcast %c6_i32_145 : i32 to vector<16x256xi32>
    %650 = arith.cmpi eq, %74, %649 : vector<16x256xi32>
    %651 = vector.extract_strided_slice %1 {offsets = [6, 6, 0], sizes = [1, 1, 256], strides = [1, 1, 1]} : vector<9x8x256xf32> to vector<1x1x256xf32>
    %652 = vector.shape_cast %651 : vector<1x1x256xf32> to vector<256xf32>
    %653 = vector.shape_cast %652 : vector<256xf32> to vector<1x256xf32>
    %cst_146 = arith.constant 0.000000e+00 : f32
    %654 = vector.shape_cast %653 : vector<1x256xf32> to vector<1x256xf32>
    %655 = vector.broadcast %654 : vector<1x256xf32> to vector<16x256xf32>
    %656 = vector.broadcast %cst_146 : f32 to vector<16x256xf32>
    %657 = arith.select %650, %655, %656 : vector<16x256xi1>, vector<16x256xf32>
    %658 = arith.addf %648, %657 : vector<16x256xf32>
    %c7_i32_147 = arith.constant 7 : i32
    %659 = vector.broadcast %c7_i32_147 : i32 to vector<16x256xi32>
    %660 = arith.cmpi eq, %74, %659 : vector<16x256xi32>
    %661 = vector.extract_strided_slice %1 {offsets = [6, 7, 0], sizes = [1, 1, 256], strides = [1, 1, 1]} : vector<9x8x256xf32> to vector<1x1x256xf32>
    %662 = vector.shape_cast %661 : vector<1x1x256xf32> to vector<256xf32>
    %663 = vector.shape_cast %662 : vector<256xf32> to vector<1x256xf32>
    %cst_148 = arith.constant 0.000000e+00 : f32
    %664 = vector.shape_cast %663 : vector<1x256xf32> to vector<1x256xf32>
    %665 = vector.broadcast %664 : vector<1x256xf32> to vector<16x256xf32>
    %666 = vector.broadcast %cst_148 : f32 to vector<16x256xf32>
    %667 = arith.select %660, %665, %666 : vector<16x256xi1>, vector<16x256xf32>
    %668 = arith.addf %658, %667 : vector<16x256xf32>
    %c0_149 = arith.constant 0 : index
    %c6 = arith.constant 6 : index
    %c0_150 = arith.constant 0 : index
    %c0_151 = arith.constant 0 : index
    %669 = vector.load %arg6[%c0_149, %c6, %c0_150, %c0_151] : memref<1x9x24x256xf32, #tpu.memory_space<vmem>>, vector<1x1x16x256xf32>
    %670 = vector.shape_cast %669 : vector<1x1x16x256xf32> to vector<16x256xf32>
    %671 = vector.shape_cast %668 : vector<16x256xf32> to vector<1x1x16x256xf32>
    tpu.vector_store %arg6[%c0_149, %c6, %c0_150, %c0_151], %671 {strides = array<i32>} : memref<1x9x24x256xf32, #tpu.memory_space<vmem>>, vector<1x1x16x256xf32>,
    %cst_152 = arith.constant 0.000000e+00 : f32
    %672 = vector.broadcast %cst_152 : f32 to vector<16x256xf32>
    %c0_i32_153 = arith.constant 0 : i32
    %673 = vector.broadcast %c0_i32_153 : i32 to vector<16x256xi32>
    %674 = arith.cmpi eq, %74, %673 : vector<16x256xi32>
    %675 = vector.extract_strided_slice %1 {offsets = [7, 0, 0], sizes = [1, 1, 256], strides = [1, 1, 1]} : vector<9x8x256xf32> to vector<1x1x256xf32>
    %676 = vector.shape_cast %675 : vector<1x1x256xf32> to vector<256xf32>
    %677 = vector.shape_cast %676 : vector<256xf32> to vector<1x256xf32>
    %cst_154 = arith.constant 0.000000e+00 : f32
    %678 = vector.shape_cast %677 : vector<1x256xf32> to vector<1x256xf32>
    %679 = vector.broadcast %678 : vector<1x256xf32> to vector<16x256xf32>
    %680 = vector.broadcast %cst_154 : f32 to vector<16x256xf32>
    %681 = arith.select %674, %679, %680 : vector<16x256xi1>, vector<16x256xf32>
    %682 = arith.addf %672, %681 : vector<16x256xf32>
    %c1_i32_155 = arith.constant 1 : i32
    %683 = vector.broadcast %c1_i32_155 : i32 to vector<16x256xi32>
    %684 = arith.cmpi eq, %74, %683 : vector<16x256xi32>
    %685 = vector.extract_strided_slice %1 {offsets = [7, 1, 0], sizes = [1, 1, 256], strides = [1, 1, 1]} : vector<9x8x256xf32> to vector<1x1x256xf32>
    %686 = vector.shape_cast %685 : vector<1x1x256xf32> to vector<256xf32>
    %687 = vector.shape_cast %686 : vector<256xf32> to vector<1x256xf32>
    %cst_156 = arith.constant 0.000000e+00 : f32
    %688 = vector.shape_cast %687 : vector<1x256xf32> to vector<1x256xf32>
    %689 = vector.broadcast %688 : vector<1x256xf32> to vector<16x256xf32>
    %690 = vector.broadcast %cst_156 : f32 to vector<16x256xf32>
    %691 = arith.select %684, %689, %690 : vector<16x256xi1>, vector<16x256xf32>
    %692 = arith.addf %682, %691 : vector<16x256xf32>
    %c2_i32_157 = arith.constant 2 : i32
    %693 = vector.broadcast %c2_i32_157 : i32 to vector<16x256xi32>
    %694 = arith.cmpi eq, %74, %693 : vector<16x256xi32>
    %695 = vector.extract_strided_slice %1 {offsets = [7, 2, 0], sizes = [1, 1, 256], strides = [1, 1, 1]} : vector<9x8x256xf32> to vector<1x1x256xf32>
    %696 = vector.shape_cast %695 : vector<1x1x256xf32> to vector<256xf32>
    %697 = vector.shape_cast %696 : vector<256xf32> to vector<1x256xf32>
    %cst_158 = arith.constant 0.000000e+00 : f32
    %698 = vector.shape_cast %697 : vector<1x256xf32> to vector<1x256xf32>
    %699 = vector.broadcast %698 : vector<1x256xf32> to vector<16x256xf32>
    %700 = vector.broadcast %cst_158 : f32 to vector<16x256xf32>
    %701 = arith.select %694, %699, %700 : vector<16x256xi1>, vector<16x256xf32>
    %702 = arith.addf %692, %701 : vector<16x256xf32>
    %c3_i32_159 = arith.constant 3 : i32
    %703 = vector.broadcast %c3_i32_159 : i32 to vector<16x256xi32>
    %704 = arith.cmpi eq, %74, %703 : vector<16x256xi32>
    %705 = vector.extract_strided_slice %1 {offsets = [7, 3, 0], sizes = [1, 1, 256], strides = [1, 1, 1]} : vector<9x8x256xf32> to vector<1x1x256xf32>
    %706 = vector.shape_cast %705 : vector<1x1x256xf32> to vector<256xf32>
    %707 = vector.shape_cast %706 : vector<256xf32> to vector<1x256xf32>
    %cst_160 = arith.constant 0.000000e+00 : f32
    %708 = vector.shape_cast %707 : vector<1x256xf32> to vector<1x256xf32>
    %709 = vector.broadcast %708 : vector<1x256xf32> to vector<16x256xf32>
    %710 = vector.broadcast %cst_160 : f32 to vector<16x256xf32>
    %711 = arith.select %704, %709, %710 : vector<16x256xi1>, vector<16x256xf32>
    %712 = arith.addf %702, %711 : vector<16x256xf32>
    %c4_i32_161 = arith.constant 4 : i32
    %713 = vector.broadcast %c4_i32_161 : i32 to vector<16x256xi32>
    %714 = arith.cmpi eq, %74, %713 : vector<16x256xi32>
    %715 = vector.extract_strided_slice %1 {offsets = [7, 4, 0], sizes = [1, 1, 256], strides = [1, 1, 1]} : vector<9x8x256xf32> to vector<1x1x256xf32>
    %716 = vector.shape_cast %715 : vector<1x1x256xf32> to vector<256xf32>
    %717 = vector.shape_cast %716 : vector<256xf32> to vector<1x256xf32>
    %cst_162 = arith.constant 0.000000e+00 : f32
    %718 = vector.shape_cast %717 : vector<1x256xf32> to vector<1x256xf32>
    %719 = vector.broadcast %718 : vector<1x256xf32> to vector<16x256xf32>
    %720 = vector.broadcast %cst_162 : f32 to vector<16x256xf32>
    %721 = arith.select %714, %719, %720 : vector<16x256xi1>, vector<16x256xf32>
    %722 = arith.addf %712, %721 : vector<16x256xf32>
    %c5_i32_163 = arith.constant 5 : i32
    %723 = vector.broadcast %c5_i32_163 : i32 to vector<16x256xi32>
    %724 = arith.cmpi eq, %74, %723 : vector<16x256xi32>
    %725 = vector.extract_strided_slice %1 {offsets = [7, 5, 0], sizes = [1, 1, 256], strides = [1, 1, 1]} : vector<9x8x256xf32> to vector<1x1x256xf32>
    %726 = vector.shape_cast %725 : vector<1x1x256xf32> to vector<256xf32>
    %727 = vector.shape_cast %726 : vector<256xf32> to vector<1x256xf32>
    %cst_164 = arith.constant 0.000000e+00 : f32
    %728 = vector.shape_cast %727 : vector<1x256xf32> to vector<1x256xf32>
    %729 = vector.broadcast %728 : vector<1x256xf32> to vector<16x256xf32>
    %730 = vector.broadcast %cst_164 : f32 to vector<16x256xf32>
    %731 = arith.select %724, %729, %730 : vector<16x256xi1>, vector<16x256xf32>
    %732 = arith.addf %722, %731 : vector<16x256xf32>
    %c6_i32_165 = arith.constant 6 : i32
    %733 = vector.broadcast %c6_i32_165 : i32 to vector<16x256xi32>
    %734 = arith.cmpi eq, %74, %733 : vector<16x256xi32>
    %735 = vector.extract_strided_slice %1 {offsets = [7, 6, 0], sizes = [1, 1, 256], strides = [1, 1, 1]} : vector<9x8x256xf32> to vector<1x1x256xf32>
    %736 = vector.shape_cast %735 : vector<1x1x256xf32> to vector<256xf32>
    %737 = vector.shape_cast %736 : vector<256xf32> to vector<1x256xf32>
    %cst_166 = arith.constant 0.000000e+00 : f32
    %738 = vector.shape_cast %737 : vector<1x256xf32> to vector<1x256xf32>
    %739 = vector.broadcast %738 : vector<1x256xf32> to vector<16x256xf32>
    %740 = vector.broadcast %cst_166 : f32 to vector<16x256xf32>
    %741 = arith.select %734, %739, %740 : vector<16x256xi1>, vector<16x256xf32>
    %742 = arith.addf %732, %741 : vector<16x256xf32>
    %c7_i32_167 = arith.constant 7 : i32
    %743 = vector.broadcast %c7_i32_167 : i32 to vector<16x256xi32>
    %744 = arith.cmpi eq, %74, %743 : vector<16x256xi32>
    %745 = vector.extract_strided_slice %1 {offsets = [7, 7, 0], sizes = [1, 1, 256], strides = [1, 1, 1]} : vector<9x8x256xf32> to vector<1x1x256xf32>
    %746 = vector.shape_cast %745 : vector<1x1x256xf32> to vector<256xf32>
    %747 = vector.shape_cast %746 : vector<256xf32> to vector<1x256xf32>
    %cst_168 = arith.constant 0.000000e+00 : f32
    %748 = vector.shape_cast %747 : vector<1x256xf32> to vector<1x256xf32>
    %749 = vector.broadcast %748 : vector<1x256xf32> to vector<16x256xf32>
    %750 = vector.broadcast %cst_168 : f32 to vector<16x256xf32>
    %751 = arith.select %744, %749, %750 : vector<16x256xi1>, vector<16x256xf32>
    %752 = arith.addf %742, %751 : vector<16x256xf32>
    %c0_169 = arith.constant 0 : index
    %c7 = arith.constant 7 : index
    %c0_170 = arith.constant 0 : index
    %c0_171 = arith.constant 0 : index
    %753 = vector.load %arg6[%c0_169, %c7, %c0_170, %c0_171] : memref<1x9x24x256xf32, #tpu.memory_space<vmem>>, vector<1x1x16x256xf32>
    %754 = vector.shape_cast %753 : vector<1x1x16x256xf32> to vector<16x256xf32>
    %755 = vector.shape_cast %752 : vector<16x256xf32> to vector<1x1x16x256xf32>
    tpu.vector_store %arg6[%c0_169, %c7, %c0_170, %c0_171], %755 {strides = array<i32>} : memref<1x9x24x256xf32, #tpu.memory_space<vmem>>, vector<1x1x16x256xf32>,
    %cst_172 = arith.constant 0.000000e+00 : f32
    %756 = vector.broadcast %cst_172 : f32 to vector<16x256xf32>
    %c0_i32_173 = arith.constant 0 : i32
    %757 = vector.broadcast %c0_i32_173 : i32 to vector<16x256xi32>
    %758 = arith.cmpi eq, %74, %757 : vector<16x256xi32>
    %759 = vector.extract_strided_slice %1 {offsets = [8, 0, 0], sizes = [1, 1, 256], strides = [1, 1, 1]} : vector<9x8x256xf32> to vector<1x1x256xf32>
    %760 = vector.shape_cast %759 : vector<1x1x256xf32> to vector<256xf32>
    %761 = vector.shape_cast %760 : vector<256xf32> to vector<1x256xf32>
    %cst_174 = arith.constant 0.000000e+00 : f32
    %762 = vector.shape_cast %761 : vector<1x256xf32> to vector<1x256xf32>
    %763 = vector.broadcast %762 : vector<1x256xf32> to vector<16x256xf32>
    %764 = vector.broadcast %cst_174 : f32 to vector<16x256xf32>
    %765 = arith.select %758, %763, %764 : vector<16x256xi1>, vector<16x256xf32>
    %766 = arith.addf %756, %765 : vector<16x256xf32>
    %c1_i32_175 = arith.constant 1 : i32
    %767 = vector.broadcast %c1_i32_175 : i32 to vector<16x256xi32>
    %768 = arith.cmpi eq, %74, %767 : vector<16x256xi32>
    %769 = vector.extract_strided_slice %1 {offsets = [8, 1, 0], sizes = [1, 1, 256], strides = [1, 1, 1]} : vector<9x8x256xf32> to vector<1x1x256xf32>
    %770 = vector.shape_cast %769 : vector<1x1x256xf32> to vector<256xf32>
    %771 = vector.shape_cast %770 : vector<256xf32> to vector<1x256xf32>
    %cst_176 = arith.constant 0.000000e+00 : f32
    %772 = vector.shape_cast %771 : vector<1x256xf32> to vector<1x256xf32>
    %773 = vector.broadcast %772 : vector<1x256xf32> to vector<16x256xf32>
    %774 = vector.broadcast %cst_176 : f32 to vector<16x256xf32>
    %775 = arith.select %768, %773, %774 : vector<16x256xi1>, vector<16x256xf32>
    %776 = arith.addf %766, %775 : vector<16x256xf32>
    %c2_i32_177 = arith.constant 2 : i32
    %777 = vector.broadcast %c2_i32_177 : i32 to vector<16x256xi32>
    %778 = arith.cmpi eq, %74, %777 : vector<16x256xi32>
    %779 = vector.extract_strided_slice %1 {offsets = [8, 2, 0], sizes = [1, 1, 256], strides = [1, 1, 1]} : vector<9x8x256xf32> to vector<1x1x256xf32>
    %780 = vector.shape_cast %779 : vector<1x1x256xf32> to vector<256xf32>
    %781 = vector.shape_cast %780 : vector<256xf32> to vector<1x256xf32>
    %cst_178 = arith.constant 0.000000e+00 : f32
    %782 = vector.shape_cast %781 : vector<1x256xf32> to vector<1x256xf32>
    %783 = vector.broadcast %782 : vector<1x256xf32> to vector<16x256xf32>
    %784 = vector.broadcast %cst_178 : f32 to vector<16x256xf32>
    %785 = arith.select %778, %783, %784 : vector<16x256xi1>, vector<16x256xf32>
    %786 = arith.addf %776, %785 : vector<16x256xf32>
    %c3_i32_179 = arith.constant 3 : i32
    %787 = vector.broadcast %c3_i32_179 : i32 to vector<16x256xi32>
    %788 = arith.cmpi eq, %74, %787 : vector<16x256xi32>
    %789 = vector.extract_strided_slice %1 {offsets = [8, 3, 0], sizes = [1, 1, 256], strides = [1, 1, 1]} : vector<9x8x256xf32> to vector<1x1x256xf32>
    %790 = vector.shape_cast %789 : vector<1x1x256xf32> to vector<256xf32>
    %791 = vector.shape_cast %790 : vector<256xf32> to vector<1x256xf32>
    %cst_180 = arith.constant 0.000000e+00 : f32
    %792 = vector.shape_cast %791 : vector<1x256xf32> to vector<1x256xf32>
    %793 = vector.broadcast %792 : vector<1x256xf32> to vector<16x256xf32>
    %794 = vector.broadcast %cst_180 : f32 to vector<16x256xf32>
    %795 = arith.select %788, %793, %794 : vector<16x256xi1>, vector<16x256xf32>
    %796 = arith.addf %786, %795 : vector<16x256xf32>
    %c4_i32_181 = arith.constant 4 : i32
    %797 = vector.broadcast %c4_i32_181 : i32 to vector<16x256xi32>
    %798 = arith.cmpi eq, %74, %797 : vector<16x256xi32>
    %799 = vector.extract_strided_slice %1 {offsets = [8, 4, 0], sizes = [1, 1, 256], strides = [1, 1, 1]} : vector<9x8x256xf32> to vector<1x1x256xf32>
    %800 = vector.shape_cast %799 : vector<1x1x256xf32> to vector<256xf32>
    %801 = vector.shape_cast %800 : vector<256xf32> to vector<1x256xf32>
    %cst_182 = arith.constant 0.000000e+00 : f32
    %802 = vector.shape_cast %801 : vector<1x256xf32> to vector<1x256xf32>
    %803 = vector.broadcast %802 : vector<1x256xf32> to vector<16x256xf32>
    %804 = vector.broadcast %cst_182 : f32 to vector<16x256xf32>
    %805 = arith.select %798, %803, %804 : vector<16x256xi1>, vector<16x256xf32>
    %806 = arith.addf %796, %805 : vector<16x256xf32>
    %c5_i32_183 = arith.constant 5 : i32
    %807 = vector.broadcast %c5_i32_183 : i32 to vector<16x256xi32>
    %808 = arith.cmpi eq, %74, %807 : vector<16x256xi32>
    %809 = vector.extract_strided_slice %1 {offsets = [8, 5, 0], sizes = [1, 1, 256], strides = [1, 1, 1]} : vector<9x8x256xf32> to vector<1x1x256xf32>
    %810 = vector.shape_cast %809 : vector<1x1x256xf32> to vector<256xf32>
    %811 = vector.shape_cast %810 : vector<256xf32> to vector<1x256xf32>
    %cst_184 = arith.constant 0.000000e+00 : f32
    %812 = vector.shape_cast %811 : vector<1x256xf32> to vector<1x256xf32>
    %813 = vector.broadcast %812 : vector<1x256xf32> to vector<16x256xf32>
    %814 = vector.broadcast %cst_184 : f32 to vector<16x256xf32>
    %815 = arith.select %808, %813, %814 : vector<16x256xi1>, vector<16x256xf32>
    %816 = arith.addf %806, %815 : vector<16x256xf32>
    %c6_i32_185 = arith.constant 6 : i32
    %817 = vector.broadcast %c6_i32_185 : i32 to vector<16x256xi32>
    %818 = arith.cmpi eq, %74, %817 : vector<16x256xi32>
    %819 = vector.extract_strided_slice %1 {offsets = [8, 6, 0], sizes = [1, 1, 256], strides = [1, 1, 1]} : vector<9x8x256xf32> to vector<1x1x256xf32>
    %820 = vector.shape_cast %819 : vector<1x1x256xf32> to vector<256xf32>
    %821 = vector.shape_cast %820 : vector<256xf32> to vector<1x256xf32>
    %cst_186 = arith.constant 0.000000e+00 : f32
    %822 = vector.shape_cast %821 : vector<1x256xf32> to vector<1x256xf32>
    %823 = vector.broadcast %822 : vector<1x256xf32> to vector<16x256xf32>
    %824 = vector.broadcast %cst_186 : f32 to vector<16x256xf32>
    %825 = arith.select %818, %823, %824 : vector<16x256xi1>, vector<16x256xf32>
    %826 = arith.addf %816, %825 : vector<16x256xf32>
    %c7_i32_187 = arith.constant 7 : i32
    %827 = vector.broadcast %c7_i32_187 : i32 to vector<16x256xi32>
    %828 = arith.cmpi eq, %74, %827 : vector<16x256xi32>
    %829 = vector.extract_strided_slice %1 {offsets = [8, 7, 0], sizes = [1, 1, 256], strides = [1, 1, 1]} : vector<9x8x256xf32> to vector<1x1x256xf32>
    %830 = vector.shape_cast %829 : vector<1x1x256xf32> to vector<256xf32>
    %831 = vector.shape_cast %830 : vector<256xf32> to vector<1x256xf32>
    %cst_188 = arith.constant 0.000000e+00 : f32
    %832 = vector.shape_cast %831 : vector<1x256xf32> to vector<1x256xf32>
    %833 = vector.broadcast %832 : vector<1x256xf32> to vector<16x256xf32>
    %834 = vector.broadcast %cst_188 : f32 to vector<16x256xf32>
    %835 = arith.select %828, %833, %834 : vector<16x256xi1>, vector<16x256xf32>
    %836 = arith.addf %826, %835 : vector<16x256xf32>
    %c0_189 = arith.constant 0 : index
    %c8 = arith.constant 8 : index
    %c0_190 = arith.constant 0 : index
    %c0_191 = arith.constant 0 : index
    %837 = vector.load %arg6[%c0_189, %c8, %c0_190, %c0_191] : memref<1x9x24x256xf32, #tpu.memory_space<vmem>>, vector<1x1x16x256xf32>
    %838 = vector.shape_cast %837 : vector<1x1x16x256xf32> to vector<16x256xf32>
    %839 = vector.shape_cast %836 : vector<16x256xf32> to vector<1x1x16x256xf32>
    tpu.vector_store %arg6[%c0_189, %c8, %c0_190, %c0_191], %839 {strides = array<i32>} : memref<1x9x24x256xf32, #tpu.memory_space<vmem>>, vector<1x1x16x256xf32>,
    %c0_192 = arith.constant 0 : index
    %c0_193 = arith.constant 0 : index
    %c16_194 = arith.constant 16 : index
    %c0_195 = arith.constant 0 : index
    %840 = vector.load %arg6[%c0_192, %c0_193, %c16_194, %c0_195] : memref<1x9x24x256xf32, #tpu.memory_space<vmem>>, vector<1x9x8x256xf32>
    %841 = vector.shape_cast %840 : vector<1x9x8x256xf32> to vector<9x8x256xf32>
    %842 = vector.shape_cast %1 : vector<9x8x256xf32> to vector<1x9x8x256xf32>
    tpu.vector_store %arg6[%c0_192, %c0_193, %c16_194, %c0_195], %842 {strides = array<i32>} : memref<1x9x24x256xf32, #tpu.memory_space<vmem>>, vector<1x9x8x256xf32>,
    return
  }
  func.func @transform_0(%arg0: i32, %arg1: i32) -> (i32, i32, i32) {
    %c0_i32 = arith.constant 0 : i32
    %c0_i32_0 = arith.constant 0 : i32
    return %arg0, %c0_i32, %arg1 : i32, i32, i32
  }
  func.func @transform_1(%arg0: i32, %arg1: i32) -> (i32, i32, i32) {
    %c0_i32 = arith.constant 0 : i32
    %c0_i32_0 = arith.constant 0 : i32
    return %arg0, %c0_i32, %arg1 : i32, i32, i32
  }
  func.func @transform_2(%arg0: i32, %arg1: i32) -> (i32, i32, i32, i32) {
    %c0_i32 = arith.constant 0 : i32
    %c0_i32_0 = arith.constant 0 : i32
    %c0_i32_1 = arith.constant 0 : i32
    return %arg0, %c0_i32, %c0_i32_0, %arg1 : i32, i32, i32, i32
  }
  func.func @transform_3(%arg0: i32, %arg1: i32) -> (i32, i32, i32) {
    %c0_i32 = arith.constant 0 : i32
    %c0_i32_0 = arith.constant 0 : i32
    return %arg0, %c0_i32, %arg1 : i32, i32, i32
  }
  func.func @transform_4(%arg0: i32, %arg1: i32) -> (i32, i32, i32, i32) {
    %c0_i32 = arith.constant 0 : i32
    %c0_i32_0 = arith.constant 0 : i32
    %c0_i32_1 = arith.constant 0 : i32
    return %arg0, %c0_i32, %c0_i32_0, %arg1 : i32, i32, i32, i32
  }
}

</mosaic_0001>

<llo_original>
// kernel: tpu_custom_call.1
$region0: #{tpu_custom_call.1}
  #allocation0 [shape = 'u32[]', space=smem, size = 0x4, offset = 0x4, fixed_abs, tag = 'smem constant byte address 0x4 - core index']
  #allocation1 [shape = 'u32[72,128]{1,0:T(1,128)}', space=vmem, size = 0x9000, scoped, tag = 'internal scratch']
  %s0 = inlined_call_operand.hbm [shape: f32[2,16,256], index: 0, kind: input, shape index: {}]
  %s1 = inlined_call_operand.hbm [shape: f32[2,8,256], index: 1, kind: input, shape index: {}]
  %s2 = inlined_call_operand.hbm [shape: f32[2,9,8,256], index: 2, kind: input, shape index: {}]
  %s3 = inlined_call_operand.hbm [shape: f32[2,24,256], index: 3, kind: output, shape index: {0}]
  %s4 = inlined_call_operand.hbm [shape: f32[2,9,24,256], index: 4, kind: output, shape index: {1}]
  %5 = xla_tuple %s3, %s4
  %s6 = sld [smem:[#allocation0]]
  $region65: #{tpu_custom_call.1} parent=0
    _
  %s8 = ssub.s32 1, %s6
  %s9 = scalar_select 0, %s8, %s6
  $region1: #{tpu_custom_call.1} parent=0
    #allocation2 [shape = 'u8[32768]{0}', space=vmem, size = 0x8000, scoped, tag = 'input window, operand 0']
    #allocation3 [shape = 's32[2]{0}', space=sflag, size = 0x8, scoped, tag = 'scoped memory for tpu_custom_call.1']
    #allocation4 [shape = 's32[2]{0}', space=sflag, size = 0x8, scoped, tag = 'scoped memory for tpu_custom_call.1']
    #allocation5 [shape = 'u8[16384]{0}', space=vmem, size = 0x4000, scoped, tag = 'input window, operand 1']
    #allocation6 [shape = 's32[2]{0}', space=sflag, size = 0x8, scoped, tag = 'scoped memory for tpu_custom_call.1']
    #allocation7 [shape = 'u8[147456]{0}', space=vmem, size = 0x24000, scoped, tag = 'input window, operand 2']
    #allocation8 [shape = 'u8[49152]{0}', space=vmem, size = 0xc000, scoped, tag = 'output window, operand 0']
    #allocation9 [shape = 'u8[442368]{0}', space=vmem, size = 0x6c000, scoped, tag = 'output window, operand 1']
    #allocation10 [shape = 's32[2]{0}', space=sflag, size = 0x8, scoped, tag = 'scoped memory for tpu_custom_call.1']
    %10 = vsyncpa [#allocation3], 0
    %s11 = scalar_lea.sflag [#allocation3], 1
    %12 = vsyncpa %s11, 0
    %13 = vsyncpa [#allocation6], 0
    %s14 = scalar_lea.sflag [#allocation6], 1
    %15 = vsyncpa %s14, 0
    %16 = vsyncpa [#allocation4], 0
    %s17 = scalar_lea.sflag [#allocation4], 1
    %18 = vsyncpa %s17, 0
    %19 = vsyncpa [#allocation10], 0
    %s20 = scalar_lea.sflag [#allocation10], 1
    %21 = vsyncpa %s20, 0
    loop: start=0, step=1, limit=4
    $region2: #{tpu_custom_call.1} parent=1 // loop_pre_header
      _
    $region3: #{tpu_custom_call.1} parent=1 // loop_header
      %s23 = sphi 0, %s27
      %p24 = scmp.ge.s32.totalorder %s23, 4
      %s30 = sphi 0, %s42
      %s31 = sphi 0, %s38
      %s32 = sphi 0, %s30
      %s33 = sphi 0, %s31
      %s34 = sphi 0, %s32
      %s35 = sphi 0, %s33
      %s47 = sphi 0, %s49
      %s50 = sphi 0, %s47
      %s51 = sphi 0, %s50
      %s67 = sphi 0, %s51
      %s75 = sphi 0, %s77
      %s78 = sphi 0, %s75
      %s79 = sphi 0, %s78
      %s95 = sphi 0, %s79
      %s103 = sphi 0, %s105
      %s106 = sphi 0, %s103
      %s107 = sphi 0, %s106
      %s123 = sphi 0, %s107
      %s131 = sphi 0, %s133
      %s134 = sphi 0, %s131
      %s135 = sphi 0, %s134
      %s151 = sphi 0, %s135
      %s159 = sphi 0, %s161
      %s162 = sphi 0, %s159
      %s163 = sphi 0, %s162
      %s179 = sphi 0, %s163
    $region4: #{tpu_custom_call.1} parent=1 // loop_header_branch
      %26 = sbr.rel (%p24) target = $region8
    $region5: #{tpu_custom_call.1} parent=1 // loop_body
      %s28 = ssub.s32 %s23, 1
      %s29 = ssub.s32 %s23, 2
      %s36 = sadd.s32 1, %s31
      %p37 = scmp.ge.s32.totalorder %s36, 1
      %s38 = scalar_select %p37, 0, %s36
      %s39 = sadd.s32 1, %s30
      %s40 = scalar_select %p37, %s39, %s30
      %p41 = scmp.ge.s32.totalorder %s40, 2
      %s42 = scalar_select %p41, 0, %s40
      %s43 = ssub.s32 %s30, %s42
      %s44 = ssub.s32 %s31, %s38
      %s45 = sor.u32 %s43, %s44
      %p46 = scmp.eq.s32.totalorder %s45, 0
      %s48 = sadd.s32 %s47, 1
      %s49 = scalar_select %p46, %s47, %s48
      %p52 = pneg %p46
      %p53 = scmp.eq.s32.totalorder %s23, 1
      %p54 = por %p52, %p53
      %p55 = scmp.ne.s32.totalorder %s47, %s50
      %p56 = scmp.eq.s32.totalorder %s23, 0
      %p57 = por %p55, %p56
      %p58 = scmp.ne.s32.totalorder %s47, %s50
      %p59 = scmp.eq.s32.totalorder %s28, 1
      %p60 = por %p58, %p59
      %p61 = scmp.ne.s32.totalorder %s50, %s51
      %p62 = scmp.eq.s32.totalorder %s28, 0
      %p63 = por %p61, %p62
      %p64 = scmp.ne.s32.totalorder %s50, %s51
      %p65 = scmp.eq.s32.totalorder %s29, 1
      %p66 = por %p64, %p65
      %p68 = scmp.ne.s32.totalorder %s51, %s67
      %p69 = scmp.eq.s32.totalorder %s29, 0
      %p70 = por %p68, %p69
      %s71 = ssub.s32 %s30, %s42
      %s72 = ssub.s32 %s31, %s38
      %s73 = sor.u32 %s71, %s72
      %p74 = scmp.eq.s32.totalorder %s73, 0
      %s76 = sadd.s32 %s75, 1
      %s77 = scalar_select %p74, %s75, %s76
      %p80 = pneg %p74
      %p81 = scmp.eq.s32.totalorder %s23, 1
      %p82 = por %p80, %p81
      %p83 = scmp.ne.s32.totalorder %s75, %s78
      %p84 = scmp.eq.s32.totalorder %s23, 0
      %p85 = por %p83, %p84
      %p86 = scmp.ne.s32.totalorder %s75, %s78
      %p87 = scmp.eq.s32.totalorder %s28, 1
      %p88 = por %p86, %p87
      %p89 = scmp.ne.s32.totalorder %s78, %s79
      %p90 = scmp.eq.s32.totalorder %s28, 0
      %p91 = por %p89, %p90
      %p92 = scmp.ne.s32.totalorder %s78, %s79
      %p93 = scmp.eq.s32.totalorder %s29, 1
      %p94 = por %p92, %p93
      %p96 = scmp.ne.s32.totalorder %s79, %s95
      %p97 = scmp.eq.s32.totalorder %s29, 0
      %p98 = por %p96, %p97
      %s99 = ssub.s32 %s30, %s42
      %s100 = ssub.s32 %s31, %s38
      %s101 = sor.u32 %s99, %s100
      %p102 = scmp.eq.s32.totalorder %s101, 0
      %s104 = sadd.s32 %s103, 1
      %s105 = scalar_select %p102, %s103, %s104
      %p108 = pneg %p102
      %p109 = scmp.eq.s32.totalorder %s23, 1
      %p110 = por %p108, %p109
      %p111 = scmp.ne.s32.totalorder %s103, %s106
      %p112 = scmp.eq.s32.totalorder %s23, 0
      %p113 = por %p111, %p112
      %p114 = scmp.ne.s32.totalorder %s103, %s106
      %p115 = scmp.eq.s32.totalorder %s28, 1
      %p116 = por %p114, %p115
      %p117 = scmp.ne.s32.totalorder %s106, %s107
      %p118 = scmp.eq.s32.totalorder %s28, 0
      %p119 = por %p117, %p118
      %p120 = scmp.ne.s32.totalorder %s106, %s107
      %p121 = scmp.eq.s32.totalorder %s29, 1
      %p122 = por %p120, %p121
      %p124 = scmp.ne.s32.totalorder %s107, %s123
      %p125 = scmp.eq.s32.totalorder %s29, 0
      %p126 = por %p124, %p125
      %s127 = ssub.s32 %s30, %s42
      %s128 = ssub.s32 %s31, %s38
      %s129 = sor.u32 %s127, %s128
      %p130 = scmp.eq.s32.totalorder %s129, 0
      %s132 = sadd.s32 %s131, 1
      %s133 = scalar_select %p130, %s131, %s132
      %p136 = pneg %p130
      %p137 = scmp.eq.s32.totalorder %s23, 1
      %p138 = por %p136, %p137
      %p139 = scmp.ne.s32.totalorder %s131, %s134
      %p140 = scmp.eq.s32.totalorder %s23, 0
      %p141 = por %p139, %p140
      %p142 = scmp.ne.s32.totalorder %s131, %s134
      %p143 = scmp.eq.s32.totalorder %s28, 1
      %p144 = por %p142, %p143
      %p145 = scmp.ne.s32.totalorder %s134, %s135
      %p146 = scmp.eq.s32.totalorder %s28, 0
      %p147 = por %p145, %p146
      %p148 = scmp.ne.s32.totalorder %s134, %s135
      %p149 = scmp.eq.s32.totalorder %s29, 1
      %p150 = por %p148, %p149
      %p152 = scmp.ne.s32.totalorder %s135, %s151
      %p153 = scmp.eq.s32.totalorder %s29, 0
      %p154 = por %p152, %p153
      %s155 = ssub.s32 %s30, %s42
      %s156 = ssub.s32 %s31, %s38
      %s157 = sor.u32 %s155, %s156
      %p158 = scmp.eq.s32.totalorder %s157, 0
      %s160 = sadd.s32 %s159, 1
      %s161 = scalar_select %p158, %s159, %s160
      %p164 = pneg %p158
      %p165 = scmp.eq.s32.totalorder %s23, 1
      %p166 = por %p164, %p165
      %p167 = scmp.ne.s32.totalorder %s159, %s162
      %p168 = scmp.eq.s32.totalorder %s23, 0
      %p169 = por %p167, %p168
      %p170 = scmp.ne.s32.totalorder %s159, %s162
      %p171 = scmp.eq.s32.totalorder %s28, 1
      %p172 = por %p170, %p171
      %p173 = scmp.ne.s32.totalorder %s162, %s163
      %p174 = scmp.eq.s32.totalorder %s28, 0
      %p175 = por %p173, %p174
      %p176 = scmp.ne.s32.totalorder %s162, %s163
      %p177 = scmp.eq.s32.totalorder %s29, 1
      %p178 = por %p176, %p177
      %p180 = scmp.ne.s32.totalorder %s163, %s179
      %p181 = scmp.eq.s32.totalorder %s29, 0
      %p182 = por %p180, %p181
      %p183 = scmp.le.s32.totalorder 1, %s23
      %p184 = scmp.lt.s32.totalorder %s23, 3
      %p185 = pnand %p183, %p184
      %p186 = pneg %p185
      // Predicated region
      $region9: #{tpu_custom_call.1} parent=5 // pred_check
        _
      $region10: #{tpu_custom_call.1} parent=5 // pred_check_branch
        %188 = sbr.rel (%p185) target = $region12
      $region11: #{tpu_custom_call.1} parent=5 // pred_region
        %s189 = ssub.s32 %s23, 1
      $region12: #{tpu_custom_call.1} parent=5 // pred_fallthru
        _
      %p190 = scmp.lt.s32.totalorder %s23, 2
      // Predicated region
      $region13: #{tpu_custom_call.1} parent=5 // pred_check
        %p191 = pneg %p190
      $region14: #{tpu_custom_call.1} parent=5 // pred_check_branch
        %193 = sbr.rel (%p191) target = $region16
      $region15: #{tpu_custom_call.1} parent=5 // pred_region
        // Predicated region
        $region17: #{tpu_custom_call.1} parent=15 // pred_check
          %p194 = pneg %p57
        $region18: #{tpu_custom_call.1} parent=15 // pred_check_branch
          %196 = sbr.rel (%p194) target = $region20
        $region19: #{tpu_custom_call.1} parent=15 // pred_region
          %s197 = sand.u32 %s47, 1
          %s198 = scalar_lea.sflag [#allocation3], %s197
          %s199 = sand.u32 %s47, 1
          %s200 = smul.addr %s199, 32
          %s201 = scalar_lea.vmem [#allocation2], %s200
          %s202 = smul.u32 2, %s31
          %204 = vsyncadd %s198, 0
          %s205 = smul.addr %s30, 4
          %s206 = sadd.s32 %s202, %s205
          %s207 = smul.addr %s206, 8
          %s208 = scalar_lea.hbm %s0, %s207
          %s209 = sshll.u32 %s208, 4
          %s210 = int_to_ptr.hbm [resolvable:$true] %s209
          %s211 = sshll.u32 %s201, 4
          %s212 = int_to_ptr.vmem [resolvable:$true] %s211
          %217 = dma.hbm_to_vmem [thread:$0]  %s210, 512, %s212, %s198, 256, 256, 16
        $region20: #{tpu_custom_call.1} parent=15 // pred_fallthru
          _
        // Predicated region
        $region21: #{tpu_custom_call.1} parent=15 // pred_check
          %p218 = pneg %p85
        $region22: #{tpu_custom_call.1} parent=15 // pred_check_branch
          %220 = sbr.rel (%p218) target = $region24
        $region23: #{tpu_custom_call.1} parent=15 // pred_region
          %s221 = sand.u32 %s23, 1
          %s222 = scalar_lea.sflag [#allocation6], %s221
          %s223 = sand.u32 %s75, 1
          %s224 = smul.addr %s223, 16
          %s225 = scalar_lea.vmem [#allocation5], %s224
          %s226 = smul.u32 2, %s31
          %228 = vsyncadd %s222, 0
          %s229 = smul.addr %s30, 2
          %s230 = sadd.s32 %s226, %s229
          %s231 = smul.addr %s230, 8
          %s232 = scalar_lea.hbm %s1, %s231
          %s234 = sshll.u32 %s232, 4
          %s235 = int_to_ptr.hbm [resolvable:$true] %s234
          %s236 = sshll.u32 %s225, 4
          %s237 = int_to_ptr.vmem [resolvable:$true] %s236
          %239 = dma.hbm_to_vmem [thread:$0]  %s235, 256, %s237, %s222
        $region24: #{tpu_custom_call.1} parent=15 // pred_fallthru
          _
        // Predicated region
        $region25: #{tpu_custom_call.1} parent=15 // pred_check
          %p240 = pneg %p113
        $region26: #{tpu_custom_call.1} parent=15 // pred_check_branch
          %242 = sbr.rel (%p240) target = $region28
        $region27: #{tpu_custom_call.1} parent=15 // pred_region
          %s243 = sand.u32 %s23, 1
          %s244 = scalar_lea.sflag [#allocation6], %s243
          %s245 = sand.u32 %s103, 1
          %s246 = smul.addr %s245, 144
          %s247 = scalar_lea.vmem [#allocation7], %s246
          %s248 = smul.u32 2, %s31
          %250 = vsyncadd %s244, 0
          %s251 = smul.addr %s30, 18
          %s252 = sadd.s32 %s248, %s251
          %s253 = smul.addr %s252, 8
          %s254 = scalar_lea.hbm %s2, %s253
          %s255 = sshll.u32 %s254, 4
          %s256 = int_to_ptr.hbm [resolvable:$true] %s255
          %s257 = sshll.u32 %s247, 4
          %s258 = int_to_ptr.vmem [resolvable:$true] %s257
          %263 = dma.hbm_to_vmem [thread:$0]  %s256, 2304, %s258, %s244, 256, 256, 16
        $region28: #{tpu_custom_call.1} parent=15 // pred_fallthru
          _
      $region16: #{tpu_custom_call.1} parent=5 // pred_fallthru
        _
      %p264 = scmp.le.s32.totalorder 1, %s23
      %p265 = scmp.lt.s32.totalorder %s23, 3
      %p266 = pnand %p264, %p265
      %p267 = pneg %p266
      // Predicated region
      $region29: #{tpu_custom_call.1} parent=5 // pred_check
        _
      $region30: #{tpu_custom_call.1} parent=5 // pred_check_branch
        %269 = sbr.rel (%p266) target = $region32
      $region31: #{tpu_custom_call.1} parent=5 // pred_region
        %s270 = ssub.s32 %s23, 1
        %s271 = sand.u32 %s50, 1
        %s272 = scalar_lea.sflag [#allocation3], %s271
        %s273 = sand.u32 %s50, 1
        %s274 = smul.addr %s273, 32
        %s275 = scalar_lea.vmem [#allocation2], %s274
        // Predicated region
        $region33: #{tpu_custom_call.1} parent=31 // pred_check
          %p276 = pneg %p63
        $region34: #{tpu_custom_call.1} parent=31 // pred_check_branch
          %278 = sbr.rel (%p276) target = $region36
        $region35: #{tpu_custom_call.1} parent=31 // pred_region
          %280 = dma.done %s272, 512
        $region36: #{tpu_custom_call.1} parent=31 // pred_fallthru
          _
        %s281 = sand.u32 %s28, 1
        %s282 = scalar_lea.sflag [#allocation6], %s281
        %s283 = sand.u32 %s78, 1
        %s284 = smul.addr %s283, 16
        %s285 = scalar_lea.vmem [#allocation5], %s284
        // Predicated region
        $region37: #{tpu_custom_call.1} parent=31 // pred_check
          %p286 = pneg %p91
        $region38: #{tpu_custom_call.1} parent=31 // pred_check_branch
          %288 = sbr.rel (%p286) target = $region40
        $region39: #{tpu_custom_call.1} parent=31 // pred_region
          %290 = dma.done %s282, 256
        $region40: #{tpu_custom_call.1} parent=31 // pred_fallthru
          _
        %s291 = sand.u32 %s28, 1
        %s292 = scalar_lea.sflag [#allocation6], %s291
        %s293 = sand.u32 %s106, 1
        %s294 = smul.addr %s293, 144
        %s295 = scalar_lea.vmem [#allocation7], %s294
        // Predicated region
        $region41: #{tpu_custom_call.1} parent=31 // pred_check
          %p296 = pneg %p119
        $region42: #{tpu_custom_call.1} parent=31 // pred_check_branch
          %298 = sbr.rel (%p296) target = $region44
        $region43: #{tpu_custom_call.1} parent=31 // pred_region
          %300 = dma.done %s292, 2304
        $region44: #{tpu_custom_call.1} parent=31 // pred_fallthru
          _
        %s301 = sand.u32 %s50, 1
        %s302 = scalar_lea.sflag [#allocation3], %s301
        %s303 = sand.u32 %s50, 1
        %s304 = smul.addr %s303, 32
        %s305 = scalar_lea.vmem [#allocation2], %s304
        %p306 = pneg %p63
        %p307 = pneg %p60
        %s308 = sand.u32 %s28, 1
        %s309 = scalar_lea.sflag [#allocation6], %s308
        %s310 = sand.u32 %s78, 1
        %s311 = smul.addr %s310, 16
        %s312 = scalar_lea.vmem [#allocation5], %s311
        %p313 = pneg %p91
        %p314 = pneg %p88
        %s315 = sand.u32 %s28, 1
        %s316 = scalar_lea.sflag [#allocation6], %s315
        %s317 = sand.u32 %s106, 1
        %s318 = smul.addr %s317, 144
        %s319 = scalar_lea.vmem [#allocation7], %s318
        %p320 = pneg %p119
        %p321 = pneg %p116
        %p322 = pneg %p147
        %p323 = pneg %p144
        %s324 = sand.u32 %s134, 1
        %s325 = scalar_lea.sflag [#allocation4], %s324
        %s326 = sand.u32 %s134, 1
        %s327 = smul.addr %s326, 48
        %s328 = scalar_lea.vmem [#allocation8], %s327
        %p329 = pneg %p175
        %p330 = pneg %p172
        %s331 = sand.u32 %s162, 1
        %s332 = scalar_lea.sflag [#allocation10], %s331
        %s333 = sand.u32 %s162, 1
        %s334 = smul.addr %s333, 432
        %s335 = scalar_lea.vmem [#allocation9], %s334
        %s336 = smul.u32 2, %s33
        %s337 = smul.u32 2, %s33
        %s338 = smul.u32 2, %s33
        %s339 = smul.u32 2, %s33
        %s340 = smul.u32 2, %s33
        %v341 = vld [vmem:[%s295] sm:$0xff]
        %v342 = vld [vmem:[%s295 + $0x8] sm:$0xff]
        %v343 = vld [vmem:[%s295 + $0x10] sm:$0xff]
        %v344 = vld [vmem:[%s295 + $0x18] sm:$0xff]
        %v345 = vld [vmem:[%s295 + $0x20] sm:$0xff]
        %v346 = vld [vmem:[%s295 + $0x28] sm:$0xff]
        %v347 = vld [vmem:[%s295 + $0x30] sm:$0xff]
        %v348 = vld [vmem:[%s295 + $0x38] sm:$0xff]
        %v349 = vld [vmem:[%s295 + $0x40] sm:$0xff]
        %v350 = vld [vmem:[%s295 + $0x48] sm:$0xff]
        %v351 = vld [vmem:[%s295 + $0x50] sm:$0xff]
        %v352 = vld [vmem:[%s295 + $0x58] sm:$0xff]
        %v353 = vld [vmem:[%s295 + $0x60] sm:$0xff]
        %v354 = vld [vmem:[%s295 + $0x68] sm:$0xff]
        %v355 = vld [vmem:[%s295 + $0x70] sm:$0xff]
        %v356 = vld [vmem:[%s295 + $0x78] sm:$0xff]
        %v357 = vld [vmem:[%s295 + $0x80] sm:$0xff]
        %v358 = vld [vmem:[%s295 + $0x88] sm:$0xff]
        %v359 = vsub.f32 %v341, %v347
        %v360 = vsub.f32 %v342, %v348
        %v361 = vsub.f32 %v343, %v349
        %v362 = vsub.f32 %v344, %v350
        %v363 = vsub.f32 %v345, %v351
        %v364 = vsub.f32 %v346, %v352
        %v365 = vmul.f32 %v359, %v359
        %v366 = vmul.f32 %v360, %v360
        %v367 = vmul.f32 %v361, %v361
        %v368 = vmul.f32 %v362, %v362
        %v369 = vmul.f32 %v363, %v363
        %v370 = vmul.f32 %v364, %v364
        %v371 = vadd.f32 %v365, %v367
        %v372 = vadd.f32 %v371, %v369
        %v373 = vadd.f32 %v366, %v368
        %v374 = vadd.f32 %v373, %v370
        %v375 = vrsqrt.pop %v372
        %v376 = vmul.f32 %v375, %v372
        %v377 = vmul.f32 %v376, %v375
        %v378 = vmul.f32 0.5, %v377
        %v379 = vsub.f32 1.5, %v378
        %v380 = vmul.f32 %v375, %v379
        %v381 = vmul.f32 %v372, %v380
        %vm382 = vcmp.eq.f32.partialorder %v372, inf
        %v383 = vsel %vm382, %v372, %v381
        %vm384 = vcmp.eq.f32.partialorder %v372, 0.0
        %v385 = vand.u32 %v372, 2147483648
        %v386 = vsel %vm384, %v385, %v383
        %v387 = vrsqrt.pop %v374
        %v388 = vmul.f32 %v387, %v374
        %v389 = vmul.f32 %v388, %v387
        %v390 = vmul.f32 0.5, %v389
        %v391 = vsub.f32 1.5, %v390
        %v392 = vmul.f32 %v387, %v391
        %v393 = vmul.f32 %v374, %v392
        %vm394 = vcmp.eq.f32.partialorder %v374, inf
        %v395 = vsel %vm394, %v374, %v393
        %vm396 = vcmp.eq.f32.partialorder %v374, 0.0
        %v397 = vand.u32 %v374, 2147483648
        %v398 = vsel %vm396, %v397, %v395
        %v399 = vsub.f32 %v347, %v353
        %v400 = vsub.f32 %v348, %v354
        %v401 = vsub.f32 %v349, %v355
        %v402 = vsub.f32 %v350, %v356
        %v403 = vsub.f32 %v351, %v357
        %v404 = vsub.f32 %v352, %v358
        %v405 = vmul.f32 %v399, %v399
        %v406 = vmul.f32 %v400, %v400
        %v407 = vmul.f32 %v401, %v401
        %v408 = vmul.f32 %v402, %v402
        %v409 = vmul.f32 %v403, %v403
        %v410 = vmul.f32 %v404, %v404
        %v411 = vadd.f32 %v405, %v407
        %v412 = vadd.f32 %v411, %v409
        %v413 = vadd.f32 %v406, %v408
        %v414 = vadd.f32 %v413, %v410
        %v415 = vrsqrt.pop %v412
        %v416 = vmul.f32 %v415, %v412
        %v417 = vmul.f32 %v416, %v415
        %v418 = vmul.f32 0.5, %v417
        %v419 = vsub.f32 1.5, %v418
        %v420 = vmul.f32 %v415, %v419
        %v421 = vmul.f32 %v412, %v420
        %vm422 = vcmp.eq.f32.partialorder %v412, inf
        %v423 = vsel %vm422, %v412, %v421
        %vm424 = vcmp.eq.f32.partialorder %v412, 0.0
        %v425 = vand.u32 %v412, 2147483648
        %v426 = vsel %vm424, %v425, %v423
        %v427 = vrsqrt.pop %v414
        %v428 = vmul.f32 %v427, %v414
        %v429 = vmul.f32 %v428, %v427
        %v430 = vmul.f32 0.5, %v429
        %v431 = vsub.f32 1.5, %v430
        %v432 = vmul.f32 %v427, %v431
        %v433 = vmul.f32 %v414, %v432
        %vm434 = vcmp.eq.f32.partialorder %v414, inf
        %v435 = vsel %vm434, %v414, %v433
        %vm436 = vcmp.eq.f32.partialorder %v414, 0.0
        %v437 = vand.u32 %v414, 2147483648
        %v438 = vsel %vm436, %v437, %v435
        %v439 = vsub.f32 %v353, %v341
        %v440 = vsub.f32 %v354, %v342
        %v441 = vsub.f32 %v355, %v343
        %v442 = vsub.f32 %v356, %v344
        %v443 = vsub.f32 %v357, %v345
        %v444 = vsub.f32 %v358, %v346
        %v445 = vmul.f32 %v439, %v439
        %v446 = vmul.f32 %v440, %v440
        %v447 = vmul.f32 %v441, %v441
        %v448 = vmul.f32 %v442, %v442
        %v449 = vmul.f32 %v443, %v443
        %v450 = vmul.f32 %v444, %v444
        %v451 = vadd.f32 %v445, %v447
        %v452 = vadd.f32 %v451, %v449
        %v453 = vadd.f32 %v446, %v448
        %v454 = vadd.f32 %v453, %v450
        %v455 = vrsqrt.pop %v452
        %v456 = vmul.f32 %v455, %v452
        %v457 = vmul.f32 %v456, %v455
        %v458 = vmul.f32 0.5, %v457
        %v459 = vsub.f32 1.5, %v458
        %v460 = vmul.f32 %v455, %v459
        %v461 = vmul.f32 %v452, %v460
        %vm462 = vcmp.eq.f32.partialorder %v452, inf
        %v463 = vsel %vm462, %v452, %v461
        %vm464 = vcmp.eq.f32.partialorder %v452, 0.0
        %v465 = vand.u32 %v452, 2147483648
        %v466 = vsel %vm464, %v465, %v463
        %v467 = vrsqrt.pop %v454
        %v468 = vmul.f32 %v467, %v454
        %v469 = vmul.f32 %v468, %v467
        %v470 = vmul.f32 0.5, %v469
        %v471 = vsub.f32 1.5, %v470
        %v472 = vmul.f32 %v467, %v471
        %v473 = vmul.f32 %v454, %v472
        %vm474 = vcmp.eq.f32.partialorder %v454, inf
        %v475 = vsel %vm474, %v454, %v473
        %vm476 = vcmp.eq.f32.partialorder %v454, 0.0
        %v477 = vand.u32 %v454, 2147483648
        %v478 = vsel %vm476, %v477, %v475
        %v479 = vadd.f32 %v386, %v426
        %v480 = vadd.f32 %v398, %v438
        %v481 = vadd.f32 %v479, %v466
        %v482 = vadd.f32 %v480, %v478
        %v483 = vadd.f32 %v481, 0.0
        %v484 = vadd.f32 %v482, 0.0
        %v487 = vrot.slane %v481, 1
        %v488 = vrot.slane %v482, 1
        %v491 = vadd.f32 %v483, %v487
        %v492 = vadd.f32 %v484, %v488
        %v493 = vrot.slane %v481, 2
        %v494 = vrot.slane %v482, 2
        %v497 = vadd.f32 %v491, %v493
        %v498 = vadd.f32 %v492, %v494
        %v499 = vrot.slane %v481, 3
        %v500 = vrot.slane %v482, 3
        %v503 = vadd.f32 %v497, %v499
        %v504 = vadd.f32 %v498, %v500
        %v505 = vrot.slane %v481, 4
        %v506 = vrot.slane %v482, 4
        %v509 = vadd.f32 %v503, %v505
        %v510 = vadd.f32 %v504, %v506
        %v511 = vrot.slane %v481, 5
        %v512 = vrot.slane %v482, 5
        %v515 = vadd.f32 %v509, %v511
        %v516 = vadd.f32 %v510, %v512
        %v517 = vrot.slane %v481, 6
        %v518 = vrot.slane %v482, 6
        %v521 = vadd.f32 %v515, %v517
        %v522 = vadd.f32 %v516, %v518
        %v523 = vrot.slane %v481, 7
        %v524 = vrot.slane %v482, 7
        %v527 = vadd.f32 %v521, %v523
        %v528 = vadd.f32 %v522, %v524
        %v529 = vld [vmem:[%s275] sm:$0xff]
        %v530 = vld [vmem:[%s275 + $0x8] sm:$0xff]
        %v531 = vld [vmem:[%s275 + $0x10] sm:$0xff]
        %v532 = vld [vmem:[%s275 + $0x18] sm:$0xff]
        %v533 = vperm.slane %v527, 0
        %v534 = vperm.slane %v528, 0
        %v535 = vmul.f32 %v529, %v533
        %v536 = vmul.f32 %v530, %v534
        %v537 = vmul.f32 %v531, %v533
        %v538 = vmul.f32 %v532, %v534
        %v539 = vperm.slane %v483, 0
        %v540 = vperm.slane %v484, 0
        %vm541 = vcmp.le.f32.partialorder %v539, %v535
        %vm542 = vcmp.le.f32.partialorder %v540, %v536
        %vm543 = vcmp.le.f32.partialorder %v539, %v537
        %vm544 = vcmp.le.f32.partialorder %v540, %v538
        %v545 = vsel %vm541, 1, 0
        %v546 = vsel %vm542, 1, 0
        %v547 = vsel %vm543, 1, 0
        %v548 = vsel %vm544, 1, 0
        %v549 = vperm.slane %v491, 0
        %v550 = vperm.slane %v492, 0
        %vm551 = vcmp.le.f32.partialorder %v549, %v535
        %vm552 = vcmp.le.f32.partialorder %v550, %v536
        %vm553 = vcmp.le.f32.partialorder %v549, %v537
        %vm554 = vcmp.le.f32.partialorder %v550, %v538
        %v555 = vsel %vm551, 1, 0
        %v556 = vsel %vm552, 1, 0
        %v557 = vsel %vm553, 1, 0
        %v558 = vsel %vm554, 1, 0
        %v559 = vadd.s32 %v545, %v555
        %v560 = vadd.s32 %v546, %v556
        %v561 = vadd.s32 %v547, %v557
        %v562 = vadd.s32 %v548, %v558
        %v563 = vperm.slane %v497, 0
        %v564 = vperm.slane %v498, 0
        %vm565 = vcmp.le.f32.partialorder %v563, %v535
        %vm566 = vcmp.le.f32.partialorder %v564, %v536
        %vm567 = vcmp.le.f32.partialorder %v563, %v537
        %vm568 = vcmp.le.f32.partialorder %v564, %v538
        %v569 = vsel %vm565, 1, 0
        %v570 = vsel %vm566, 1, 0
        %v571 = vsel %vm567, 1, 0
        %v572 = vsel %vm568, 1, 0
        %v573 = vadd.s32 %v559, %v569
        %v574 = vadd.s32 %v560, %v570
        %v575 = vadd.s32 %v561, %v571
        %v576 = vadd.s32 %v562, %v572
        %v577 = vperm.slane %v503, 0
        %v578 = vperm.slane %v504, 0
        %vm579 = vcmp.le.f32.partialorder %v577, %v535
        %vm580 = vcmp.le.f32.partialorder %v578, %v536
        %vm581 = vcmp.le.f32.partialorder %v577, %v537
        %vm582 = vcmp.le.f32.partialorder %v578, %v538
        %v583 = vsel %vm579, 1, 0
        %v584 = vsel %vm580, 1, 0
        %v585 = vsel %vm581, 1, 0
        %v586 = vsel %vm582, 1, 0
        %v587 = vadd.s32 %v573, %v583
        %v588 = vadd.s32 %v574, %v584
        %v589 = vadd.s32 %v575, %v585
        %v590 = vadd.s32 %v576, %v586
        %v591 = vperm.slane %v509, 0
        %v592 = vperm.slane %v510, 0
        %vm593 = vcmp.le.f32.partialorder %v591, %v535
        %vm594 = vcmp.le.f32.partialorder %v592, %v536
        %vm595 = vcmp.le.f32.partialorder %v591, %v537
        %vm596 = vcmp.le.f32.partialorder %v592, %v538
        %v597 = vsel %vm593, 1, 0
        %v598 = vsel %vm594, 1, 0
        %v599 = vsel %vm595, 1, 0
        %v600 = vsel %vm596, 1, 0
        %v601 = vadd.s32 %v587, %v597
        %v602 = vadd.s32 %v588, %v598
        %v603 = vadd.s32 %v589, %v599
        %v604 = vadd.s32 %v590, %v600
        %v605 = vperm.slane %v515, 0
        %v606 = vperm.slane %v516, 0
        %vm607 = vcmp.le.f32.partialorder %v605, %v535
        %vm608 = vcmp.le.f32.partialorder %v606, %v536
        %vm609 = vcmp.le.f32.partialorder %v605, %v537
        %vm610 = vcmp.le.f32.partialorder %v606, %v538
        %v611 = vsel %vm607, 1, 0
        %v612 = vsel %vm608, 1, 0
        %v613 = vsel %vm609, 1, 0
        %v614 = vsel %vm610, 1, 0
        %v615 = vadd.s32 %v601, %v611
        %v616 = vadd.s32 %v602, %v612
        %v617 = vadd.s32 %v603, %v613
        %v618 = vadd.s32 %v604, %v614
        %v619 = vperm.slane %v521, 0
        %v620 = vperm.slane %v522, 0
        %vm621 = vcmp.le.f32.partialorder %v619, %v535
        %vm622 = vcmp.le.f32.partialorder %v620, %v536
        %vm623 = vcmp.le.f32.partialorder %v619, %v537
        %vm624 = vcmp.le.f32.partialorder %v620, %v538
        %v625 = vsel %vm621, 1, 0
        %v626 = vsel %vm622, 1, 0
        %v627 = vsel %vm623, 1, 0
        %v628 = vsel %vm624, 1, 0
        %v629 = vadd.s32 %v615, %v625
        %v630 = vadd.s32 %v616, %v626
        %v631 = vadd.s32 %v617, %v627
        %v632 = vadd.s32 %v618, %v628
        %vm633 = vcmp.le.f32.partialorder %v533, %v535
        %vm634 = vcmp.le.f32.partialorder %v534, %v536
        %vm635 = vcmp.le.f32.partialorder %v533, %v537
        %vm636 = vcmp.le.f32.partialorder %v534, %v538
        %v637 = vsel %vm633, 1, 0
        %v638 = vsel %vm634, 1, 0
        %v639 = vsel %vm635, 1, 0
        %v640 = vsel %vm636, 1, 0
        %v641 = vadd.s32 %v629, %v637
        %v642 = vadd.s32 %v630, %v638
        %v643 = vadd.s32 %v631, %v639
        %v644 = vadd.s32 %v632, %v640
        %vm645 = vcmp.lt.s32.totalorder %v641, 7
        %v646 = vsel %vm645, %v641, 7
        %vm647 = vcmp.lt.s32.totalorder %v642, 7
        %v648 = vsel %vm647, %v642, 7
        %vm649 = vcmp.lt.s32.totalorder %v643, 7
        %v650 = vsel %vm649, %v643, 7
        %vm651 = vcmp.lt.s32.totalorder %v644, 7
        %v652 = vsel %vm651, %v644, 7
        %v653 = vcvt.s32.f32 %v646
        %v654 = vcvt.s32.f32 %v648
        %v655 = vcvt.s32.f32 %v650
        %v656 = vcvt.s32.f32 %v652
        %657 = vst [vmem:[%s328] sm:$0xff] %v653
        %658 = vst [vmem:[%s328 + $0x8] sm:$0xff] %v654
        %659 = vst [vmem:[%s328 + $0x10] sm:$0xff] %v655
        %660 = vst [vmem:[%s328 + $0x18] sm:$0xff] %v656
        %v661 = vld [vmem:[%s285] sm:$0xff]
        %v662 = vld [vmem:[%s285 + $0x8] sm:$0xff]
        %663 = vst [vmem:[%s328 + $0x20] sm:$0xff] %v661
        %664 = vst [vmem:[%s328 + $0x28] sm:$0xff] %v662
        %vm665 = vcmp.eq.s32.totalorder %v646, 0
        %vm666 = vcmp.eq.s32.totalorder %v648, 0
        %vm667 = vcmp.eq.s32.totalorder %v650, 0
        %vm668 = vcmp.eq.s32.totalorder %v652, 0
        %v669 = vperm.slane %v341, 0
        %v670 = vperm.slane %v342, 0
        %v671 = vsel %vm665, %v669, 0.0
        %v672 = vsel %vm666, %v670, 0.0
        %v673 = vsel %vm667, %v669, 0.0
        %v674 = vsel %vm668, %v670, 0.0
        %v675 = vadd.f32 %v671, 0.0
        %v676 = vadd.f32 %v672, 0.0
        %v677 = vadd.f32 %v673, 0.0
        %v678 = vadd.f32 %v674, 0.0
        %vm679 = vcmp.eq.s32.totalorder %v646, 1
        %vm680 = vcmp.eq.s32.totalorder %v648, 1
        %vm681 = vcmp.eq.s32.totalorder %v650, 1
        %vm682 = vcmp.eq.s32.totalorder %v652, 1
        %v683 = vperm.slane %v341, 1
        %v684 = vperm.slane %v342, 1
        %v685 = vsel %vm679, %v683, 0.0
        %v686 = vsel %vm680, %v684, 0.0
        %v687 = vsel %vm681, %v683, 0.0
        %v688 = vsel %vm682, %v684, 0.0
        %v689 = vadd.f32 %v675, %v685
        %v690 = vadd.f32 %v676, %v686
        %v691 = vadd.f32 %v677, %v687
        %v692 = vadd.f32 %v678, %v688
        %vm693 = vcmp.eq.s32.totalorder %v646, 2
        %vm694 = vcmp.eq.s32.totalorder %v648, 2
        %vm695 = vcmp.eq.s32.totalorder %v650, 2
        %vm696 = vcmp.eq.s32.totalorder %v652, 2
        %v697 = vperm.slane %v341, 2
        %v698 = vperm.slane %v342, 2
        %v699 = vsel %vm693, %v697, 0.0
        %v700 = vsel %vm694, %v698, 0.0
        %v701 = vsel %vm695, %v697, 0.0
        %v702 = vsel %vm696, %v698, 0.0
        %v703 = vadd.f32 %v689, %v699
        %v704 = vadd.f32 %v690, %v700
        %v705 = vadd.f32 %v691, %v701
        %v706 = vadd.f32 %v692, %v702
        %vm707 = vcmp.eq.s32.totalorder %v646, 3
        %vm708 = vcmp.eq.s32.totalorder %v648, 3
        %vm709 = vcmp.eq.s32.totalorder %v650, 3
        %vm710 = vcmp.eq.s32.totalorder %v652, 3
        %v711 = vperm.slane %v341, 3
        %v712 = vperm.slane %v342, 3
        %v713 = vsel %vm707, %v711, 0.0
        %v714 = vsel %vm708, %v712, 0.0
        %v715 = vsel %vm709, %v711, 0.0
        %v716 = vsel %vm710, %v712, 0.0
        %v717 = vadd.f32 %v703, %v713
        %v718 = vadd.f32 %v704, %v714
        %v719 = vadd.f32 %v705, %v715
        %v720 = vadd.f32 %v706, %v716
        %vm721 = vcmp.eq.s32.totalorder %v646, 4
        %vm722 = vcmp.eq.s32.totalorder %v648, 4
        %vm723 = vcmp.eq.s32.totalorder %v650, 4
        %vm724 = vcmp.eq.s32.totalorder %v652, 4
        %v725 = vperm.slane %v341, 4
        %v726 = vperm.slane %v342, 4
        %v727 = vsel %vm721, %v725, 0.0
        %v728 = vsel %vm722, %v726, 0.0
        %v729 = vsel %vm723, %v725, 0.0
        %v730 = vsel %vm724, %v726, 0.0
        %v731 = vadd.f32 %v717, %v727
        %v732 = vadd.f32 %v718, %v728
        %v733 = vadd.f32 %v719, %v729
        %v734 = vadd.f32 %v720, %v730
        %vm735 = vcmp.eq.s32.totalorder %v646, 5
        %vm736 = vcmp.eq.s32.totalorder %v648, 5
        %vm737 = vcmp.eq.s32.totalorder %v650, 5
        %vm738 = vcmp.eq.s32.totalorder %v652, 5
        %v739 = vperm.slane %v341, 5
        %v740 = vperm.slane %v342, 5
        %v741 = vsel %vm735, %v739, 0.0
        %v742 = vsel %vm736, %v740, 0.0
        %v743 = vsel %vm737, %v739, 0.0
        %v744 = vsel %vm738, %v740, 0.0
        %v745 = vadd.f32 %v731, %v741
        %v746 = vadd.f32 %v732, %v742
        %v747 = vadd.f32 %v733, %v743
        %v748 = vadd.f32 %v734, %v744
        %vm749 = vcmp.eq.s32.totalorder %v646, 6
        %vm750 = vcmp.eq.s32.totalorder %v648, 6
        %vm751 = vcmp.eq.s32.totalorder %v650, 6
        %vm752 = vcmp.eq.s32.totalorder %v652, 6
        %v753 = vperm.slane %v341, 6
        %v754 = vperm.slane %v342, 6
        %v755 = vsel %vm749, %v753, 0.0
        %v756 = vsel %vm750, %v754, 0.0
        %v757 = vsel %vm751, %v753, 0.0
        %v758 = vsel %vm752, %v754, 0.0
        %v759 = vadd.f32 %v745, %v755
        %v760 = vadd.f32 %v746, %v756
        %v761 = vadd.f32 %v747, %v757
        %v762 = vadd.f32 %v748, %v758
        %vm763 = vcmp.eq.s32.totalorder %v646, 7
        %vm764 = vcmp.eq.s32.totalorder %v648, 7
        %vm765 = vcmp.eq.s32.totalorder %v650, 7
        %vm766 = vcmp.eq.s32.totalorder %v652, 7
        %v767 = vperm.slane %v341, 7
        %v768 = vperm.slane %v342, 7
        %v769 = vsel %vm763, %v767, 0.0
        %v770 = vsel %vm764, %v768, 0.0
        %v771 = vsel %vm765, %v767, 0.0
        %v772 = vsel %vm766, %v768, 0.0
        %v773 = vadd.f32 %v759, %v769
        %v774 = vadd.f32 %v760, %v770
        %v775 = vadd.f32 %v761, %v771
        %v776 = vadd.f32 %v762, %v772
        %777 = vst [vmem:[%s335] sm:$0xff] %v773
        %778 = vst [vmem:[%s335 + $0x8] sm:$0xff] %v774
        %779 = vst [vmem:[%s335 + $0x10] sm:$0xff] %v775
        %780 = vst [vmem:[%s335 + $0x18] sm:$0xff] %v776
        %v781 = vperm.slane %v343, 0
        %v782 = vperm.slane %v344, 0
        %v783 = vsel %vm665, %v781, 0.0
        %v784 = vsel %vm666, %v782, 0.0
        %v785 = vsel %vm667, %v781, 0.0
        %v786 = vsel %vm668, %v782, 0.0
        %v787 = vadd.f32 %v783, 0.0
        %v788 = vadd.f32 %v784, 0.0
        %v789 = vadd.f32 %v785, 0.0
        %v790 = vadd.f32 %v786, 0.0
        %v791 = vperm.slane %v343, 1
        %v792 = vperm.slane %v344, 1
        %v793 = vsel %vm679, %v791, 0.0
        %v794 = vsel %vm680, %v792, 0.0
        %v795 = vsel %vm681, %v791, 0.0
        %v796 = vsel %vm682, %v792, 0.0
        %v797 = vadd.f32 %v787, %v793
        %v798 = vadd.f32 %v788, %v794
        %v799 = vadd.f32 %v789, %v795
        %v800 = vadd.f32 %v790, %v796
        %v801 = vperm.slane %v343, 2
        %v802 = vperm.slane %v344, 2
        %v803 = vsel %vm693, %v801, 0.0
        %v804 = vsel %vm694, %v802, 0.0
        %v805 = vsel %vm695, %v801, 0.0
        %v806 = vsel %vm696, %v802, 0.0
        %v807 = vadd.f32 %v797, %v803
        %v808 = vadd.f32 %v798, %v804
        %v809 = vadd.f32 %v799, %v805
        %v810 = vadd.f32 %v800, %v806
        %v811 = vperm.slane %v343, 3
        %v812 = vperm.slane %v344, 3
        %v813 = vsel %vm707, %v811, 0.0
        %v814 = vsel %vm708, %v812, 0.0
        %v815 = vsel %vm709, %v811, 0.0
        %v816 = vsel %vm710, %v812, 0.0
        %v817 = vadd.f32 %v807, %v813
        %v818 = vadd.f32 %v808, %v814
        %v819 = vadd.f32 %v809, %v815
        %v820 = vadd.f32 %v810, %v816
        %v821 = vperm.slane %v343, 4
        %v822 = vperm.slane %v344, 4
        %v823 = vsel %vm721, %v821, 0.0
        %v824 = vsel %vm722, %v822, 0.0
        %v825 = vsel %vm723, %v821, 0.0
        %v826 = vsel %vm724, %v822, 0.0
        %v827 = vadd.f32 %v817, %v823
        %v828 = vadd.f32 %v818, %v824
        %v829 = vadd.f32 %v819, %v825
        %v830 = vadd.f32 %v820, %v826
        %v831 = vperm.slane %v343, 5
        %v832 = vperm.slane %v344, 5
        %v833 = vsel %vm735, %v831, 0.0
        %v834 = vsel %vm736, %v832, 0.0
        %v835 = vsel %vm737, %v831, 0.0
        %v836 = vsel %vm738, %v832, 0.0
        %v837 = vadd.f32 %v827, %v833
        %v838 = vadd.f32 %v828, %v834
        %v839 = vadd.f32 %v829, %v835
        %v840 = vadd.f32 %v830, %v836
        %v841 = vperm.slane %v343, 6
        %v842 = vperm.slane %v344, 6
        %v843 = vsel %vm749, %v841, 0.0
        %v844 = vsel %vm750, %v842, 0.0
        %v845 = vsel %vm751, %v841, 0.0
        %v846 = vsel %vm752, %v842, 0.0
        %v847 = vadd.f32 %v837, %v843
        %v848 = vadd.f32 %v838, %v844
        %v849 = vadd.f32 %v839, %v845
        %v850 = vadd.f32 %v840, %v846
        %v851 = vperm.slane %v343, 7
        %v852 = vperm.slane %v344, 7
        %v853 = vsel %vm763, %v851, 0.0
        %v854 = vsel %vm764, %v852, 0.0
        %v855 = vsel %vm765, %v851, 0.0
        %v856 = vsel %vm766, %v852, 0.0
        %v857 = vadd.f32 %v847, %v853
        %v858 = vadd.f32 %v848, %v854
        %v859 = vadd.f32 %v849, %v855
        %v860 = vadd.f32 %v850, %v856
        %s861 = scalar_lea.vmem %s335, 48 [#allocation9]
        %862 = vst [vmem:[%s861] sm:$0xff] %v857
        %863 = vst [vmem:[%s861 + $0x8] sm:$0xff] %v858
        %864 = vst [vmem:[%s861 + $0x10] sm:$0xff] %v859
        %865 = vst [vmem:[%s861 + $0x18] sm:$0xff] %v860
        %v866 = vperm.slane %v345, 0
        %v867 = vperm.slane %v346, 0
        %v868 = vsel %vm665, %v866, 0.0
        %v869 = vsel %vm666, %v867, 0.0
        %v870 = vsel %vm667, %v866, 0.0
        %v871 = vsel %vm668, %v867, 0.0
        %v872 = vadd.f32 %v868, 0.0
        %v873 = vadd.f32 %v869, 0.0
        %v874 = vadd.f32 %v870, 0.0
        %v875 = vadd.f32 %v871, 0.0
        %v876 = vperm.slane %v345, 1
        %v877 = vperm.slane %v346, 1
        %v878 = vsel %vm679, %v876, 0.0
        %v879 = vsel %vm680, %v877, 0.0
        %v880 = vsel %vm681, %v876, 0.0
        %v881 = vsel %vm682, %v877, 0.0
        %v882 = vadd.f32 %v872, %v878
        %v883 = vadd.f32 %v873, %v879
        %v884 = vadd.f32 %v874, %v880
        %v885 = vadd.f32 %v875, %v881
        %v886 = vperm.slane %v345, 2
        %v887 = vperm.slane %v346, 2
        %v888 = vsel %vm693, %v886, 0.0
        %v889 = vsel %vm694, %v887, 0.0
        %v890 = vsel %vm695, %v886, 0.0
        %v891 = vsel %vm696, %v887, 0.0
        %v892 = vadd.f32 %v882, %v888
        %v893 = vadd.f32 %v883, %v889
        %v894 = vadd.f32 %v884, %v890
        %v895 = vadd.f32 %v885, %v891
        %v896 = vperm.slane %v345, 3
        %v897 = vperm.slane %v346, 3
        %v898 = vsel %vm707, %v896, 0.0
        %v899 = vsel %vm708, %v897, 0.0
        %v900 = vsel %vm709, %v896, 0.0
        %v901 = vsel %vm710, %v897, 0.0
        %v902 = vadd.f32 %v892, %v898
        %v903 = vadd.f32 %v893, %v899
        %v904 = vadd.f32 %v894, %v900
        %v905 = vadd.f32 %v895, %v901
        %v906 = vperm.slane %v345, 4
        %v907 = vperm.slane %v346, 4
        %v908 = vsel %vm721, %v906, 0.0
        %v909 = vsel %vm722, %v907, 0.0
        %v910 = vsel %vm723, %v906, 0.0
        %v911 = vsel %vm724, %v907, 0.0
        %v912 = vadd.f32 %v902, %v908
        %v913 = vadd.f32 %v903, %v909
        %v914 = vadd.f32 %v904, %v910
        %v915 = vadd.f32 %v905, %v911
        %v916 = vperm.slane %v345, 5
        %v917 = vperm.slane %v346, 5
        %v918 = vsel %vm735, %v916, 0.0
        %v919 = vsel %vm736, %v917, 0.0
        %v920 = vsel %vm737, %v916, 0.0
        %v921 = vsel %vm738, %v917, 0.0
        %v922 = vadd.f32 %v912, %v918
        %v923 = vadd.f32 %v913, %v919
        %v924 = vadd.f32 %v914, %v920
        %v925 = vadd.f32 %v915, %v921
        %v926 = vperm.slane %v345, 6
        %v927 = vperm.slane %v346, 6
        %v928 = vsel %vm749, %v926, 0.0
        %v929 = vsel %vm750, %v927, 0.0
        %v930 = vsel %vm751, %v926, 0.0
        %v931 = vsel %vm752, %v927, 0.0
        %v932 = vadd.f32 %v922, %v928
        %v933 = vadd.f32 %v923, %v929
        %v934 = vadd.f32 %v924, %v930
        %v935 = vadd.f32 %v925, %v931
        %v936 = vperm.slane %v345, 7
        %v937 = vperm.slane %v346, 7
        %v938 = vsel %vm763, %v936, 0.0
        %v939 = vsel %vm764, %v937, 0.0
        %v940 = vsel %vm765, %v936, 0.0
        %v941 = vsel %vm766, %v937, 0.0
        %v942 = vadd.f32 %v932, %v938
        %v943 = vadd.f32 %v933, %v939
        %v944 = vadd.f32 %v934, %v940
        %v945 = vadd.f32 %v935, %v941
        %s946 = scalar_lea.vmem %s335, 96 [#allocation9]
        %947 = vst [vmem:[%s946] sm:$0xff] %v942
        %948 = vst [vmem:[%s946 + $0x8] sm:$0xff] %v943
        %949 = vst [vmem:[%s946 + $0x10] sm:$0xff] %v944
        %950 = vst [vmem:[%s946 + $0x18] sm:$0xff] %v945
        %v951 = vperm.slane %v347, 0
        %v952 = vperm.slane %v348, 0
        %v953 = vsel %vm665, %v951, 0.0
        %v954 = vsel %vm666, %v952, 0.0
        %v955 = vsel %vm667, %v951, 0.0
        %v956 = vsel %vm668, %v952, 0.0
        %v957 = vadd.f32 %v953, 0.0
        %v958 = vadd.f32 %v954, 0.0
        %v959 = vadd.f32 %v955, 0.0
        %v960 = vadd.f32 %v956, 0.0
        %v961 = vperm.slane %v347, 1
        %v962 = vperm.slane %v348, 1
        %v963 = vsel %vm679, %v961, 0.0
        %v964 = vsel %vm680, %v962, 0.0
        %v965 = vsel %vm681, %v961, 0.0
        %v966 = vsel %vm682, %v962, 0.0
        %v967 = vadd.f32 %v957, %v963
        %v968 = vadd.f32 %v958, %v964
        %v969 = vadd.f32 %v959, %v965
        %v970 = vadd.f32 %v960, %v966
        %v971 = vperm.slane %v347, 2
        %v972 = vperm.slane %v348, 2
        %v973 = vsel %vm693, %v971, 0.0
        %v974 = vsel %vm694, %v972, 0.0
        %v975 = vsel %vm695, %v971, 0.0
        %v976 = vsel %vm696, %v972, 0.0
        %v977 = vadd.f32 %v967, %v973
        %v978 = vadd.f32 %v968, %v974
        %v979 = vadd.f32 %v969, %v975
        %v980 = vadd.f32 %v970, %v976
        %v981 = vperm.slane %v347, 3
        %v982 = vperm.slane %v348, 3
        %v983 = vsel %vm707, %v981, 0.0
        %v984 = vsel %vm708, %v982, 0.0
        %v985 = vsel %vm709, %v981, 0.0
        %v986 = vsel %vm710, %v982, 0.0
        %v987 = vadd.f32 %v977, %v983
        %v988 = vadd.f32 %v978, %v984
        %v989 = vadd.f32 %v979, %v985
        %v990 = vadd.f32 %v980, %v986
        %v991 = vperm.slane %v347, 4
        %v992 = vperm.slane %v348, 4
        %v993 = vsel %vm721, %v991, 0.0
        %v994 = vsel %vm722, %v992, 0.0
        %v995 = vsel %vm723, %v991, 0.0
        %v996 = vsel %vm724, %v992, 0.0
        %v997 = vadd.f32 %v987, %v993
        %v998 = vadd.f32 %v988, %v994
        %v999 = vadd.f32 %v989, %v995
        %v1000 = vadd.f32 %v990, %v996
        %v1001 = vperm.slane %v347, 5
        %v1002 = vperm.slane %v348, 5
        %v1003 = vsel %vm735, %v1001, 0.0
        %v1004 = vsel %vm736, %v1002, 0.0
        %v1005 = vsel %vm737, %v1001, 0.0
        %v1006 = vsel %vm738, %v1002, 0.0
        %v1007 = vadd.f32 %v997, %v1003
        %v1008 = vadd.f32 %v998, %v1004
        %v1009 = vadd.f32 %v999, %v1005
        %v1010 = vadd.f32 %v1000, %v1006
        %v1011 = vperm.slane %v347, 6
        %v1012 = vperm.slane %v348, 6
        %v1013 = vsel %vm749, %v1011, 0.0
        %v1014 = vsel %vm750, %v1012, 0.0
        %v1015 = vsel %vm751, %v1011, 0.0
        %v1016 = vsel %vm752, %v1012, 0.0
        %v1017 = vadd.f32 %v1007, %v1013
        %v1018 = vadd.f32 %v1008, %v1014
        %v1019 = vadd.f32 %v1009, %v1015
        %v1020 = vadd.f32 %v1010, %v1016
        %v1021 = vperm.slane %v347, 7
        %v1022 = vperm.slane %v348, 7
        %v1023 = vsel %vm763, %v1021, 0.0
        %v1024 = vsel %vm764, %v1022, 0.0
        %v1025 = vsel %vm765, %v1021, 0.0
        %v1026 = vsel %vm766, %v1022, 0.0
        %v1027 = vadd.f32 %v1017, %v1023
        %v1028 = vadd.f32 %v1018, %v1024
        %v1029 = vadd.f32 %v1019, %v1025
        %v1030 = vadd.f32 %v1020, %v1026
        %s1031 = scalar_lea.vmem %s335, 144 [#allocation9]
        %1032 = vst [vmem:[%s1031] sm:$0xff] %v1027
        %1033 = vst [vmem:[%s1031 + $0x8] sm:$0xff] %v1028
        %1034 = vst [vmem:[%s1031 + $0x10] sm:$0xff] %v1029
        %1035 = vst [vmem:[%s1031 + $0x18] sm:$0xff] %v1030
        %v1036 = vperm.slane %v349, 0
        %v1037 = vperm.slane %v350, 0
        %v1038 = vsel %vm665, %v1036, 0.0
        %v1039 = vsel %vm666, %v1037, 0.0
        %v1040 = vsel %vm667, %v1036, 0.0
        %v1041 = vsel %vm668, %v1037, 0.0
        %v1042 = vadd.f32 %v1038, 0.0
        %v1043 = vadd.f32 %v1039, 0.0
        %v1044 = vadd.f32 %v1040, 0.0
        %v1045 = vadd.f32 %v1041, 0.0
        %v1046 = vperm.slane %v349, 1
        %v1047 = vperm.slane %v350, 1
        %v1048 = vsel %vm679, %v1046, 0.0
        %v1049 = vsel %vm680, %v1047, 0.0
        %v1050 = vsel %vm681, %v1046, 0.0
        %v1051 = vsel %vm682, %v1047, 0.0
        %v1052 = vadd.f32 %v1042, %v1048
        %v1053 = vadd.f32 %v1043, %v1049
        %v1054 = vadd.f32 %v1044, %v1050
        %v1055 = vadd.f32 %v1045, %v1051
        %v1056 = vperm.slane %v349, 2
        %v1057 = vperm.slane %v350, 2
        %v1058 = vsel %vm693, %v1056, 0.0
        %v1059 = vsel %vm694, %v1057, 0.0
        %v1060 = vsel %vm695, %v1056, 0.0
        %v1061 = vsel %vm696, %v1057, 0.0
        %v1062 = vadd.f32 %v1052, %v1058
        %v1063 = vadd.f32 %v1053, %v1059
        %v1064 = vadd.f32 %v1054, %v1060
        %v1065 = vadd.f32 %v1055, %v1061
        %v1066 = vperm.slane %v349, 3
        %v1067 = vperm.slane %v350, 3
        %v1068 = vsel %vm707, %v1066, 0.0
        %v1069 = vsel %vm708, %v1067, 0.0
        %v1070 = vsel %vm709, %v1066, 0.0
        %v1071 = vsel %vm710, %v1067, 0.0
        %v1072 = vadd.f32 %v1062, %v1068
        %v1073 = vadd.f32 %v1063, %v1069
        %v1074 = vadd.f32 %v1064, %v1070
        %v1075 = vadd.f32 %v1065, %v1071
        %v1076 = vperm.slane %v349, 4
        %v1077 = vperm.slane %v350, 4
        %v1078 = vsel %vm721, %v1076, 0.0
        %v1079 = vsel %vm722, %v1077, 0.0
        %v1080 = vsel %vm723, %v1076, 0.0
        %v1081 = vsel %vm724, %v1077, 0.0
        %v1082 = vadd.f32 %v1072, %v1078
        %v1083 = vadd.f32 %v1073, %v1079
        %v1084 = vadd.f32 %v1074, %v1080
        %v1085 = vadd.f32 %v1075, %v1081
        %v1086 = vperm.slane %v349, 5
        %v1087 = vperm.slane %v350, 5
        %v1088 = vsel %vm735, %v1086, 0.0
        %v1089 = vsel %vm736, %v1087, 0.0
        %v1090 = vsel %vm737, %v1086, 0.0
        %v1091 = vsel %vm738, %v1087, 0.0
        %v1092 = vadd.f32 %v1082, %v1088
        %v1093 = vadd.f32 %v1083, %v1089
        %v1094 = vadd.f32 %v1084, %v1090
        %v1095 = vadd.f32 %v1085, %v1091
        %v1096 = vperm.slane %v349, 6
        %v1097 = vperm.slane %v350, 6
        %v1098 = vsel %vm749, %v1096, 0.0
        %v1099 = vsel %vm750, %v1097, 0.0
        %v1100 = vsel %vm751, %v1096, 0.0
        %v1101 = vsel %vm752, %v1097, 0.0
        %v1102 = vadd.f32 %v1092, %v1098
        %v1103 = vadd.f32 %v1093, %v1099
        %v1104 = vadd.f32 %v1094, %v1100
        %v1105 = vadd.f32 %v1095, %v1101
        %v1106 = vperm.slane %v349, 7
        %v1107 = vperm.slane %v350, 7
        %v1108 = vsel %vm763, %v1106, 0.0
        %v1109 = vsel %vm764, %v1107, 0.0
        %v1110 = vsel %vm765, %v1106, 0.0
        %v1111 = vsel %vm766, %v1107, 0.0
        %v1112 = vadd.f32 %v1102, %v1108
        %v1113 = vadd.f32 %v1103, %v1109
        %v1114 = vadd.f32 %v1104, %v1110
        %v1115 = vadd.f32 %v1105, %v1111
        %s1116 = scalar_lea.vmem %s335, 192 [#allocation9]
        %1117 = vst [vmem:[%s1116] sm:$0xff] %v1112
        %1118 = vst [vmem:[%s1116 + $0x8] sm:$0xff] %v1113
        %1119 = vst [vmem:[%s1116 + $0x10] sm:$0xff] %v1114
        %1120 = vst [vmem:[%s1116 + $0x18] sm:$0xff] %v1115
        %v1121 = vperm.slane %v351, 0
        %v1122 = vperm.slane %v352, 0
        %v1123 = vsel %vm665, %v1121, 0.0
        %v1124 = vsel %vm666, %v1122, 0.0
        %v1125 = vsel %vm667, %v1121, 0.0
        %v1126 = vsel %vm668, %v1122, 0.0
        %v1127 = vadd.f32 %v1123, 0.0
        %v1128 = vadd.f32 %v1124, 0.0
        %v1129 = vadd.f32 %v1125, 0.0
        %v1130 = vadd.f32 %v1126, 0.0
        %v1131 = vperm.slane %v351, 1
        %v1132 = vperm.slane %v352, 1
        %v1133 = vsel %vm679, %v1131, 0.0
        %v1134 = vsel %vm680, %v1132, 0.0
        %v1135 = vsel %vm681, %v1131, 0.0
        %v1136 = vsel %vm682, %v1132, 0.0
        %v1137 = vadd.f32 %v1127, %v1133
        %v1138 = vadd.f32 %v1128, %v1134
        %v1139 = vadd.f32 %v1129, %v1135
        %v1140 = vadd.f32 %v1130, %v1136
        %v1141 = vperm.slane %v351, 2
        %v1142 = vperm.slane %v352, 2
        %v1143 = vsel %vm693, %v1141, 0.0
        %v1144 = vsel %vm694, %v1142, 0.0
        %v1145 = vsel %vm695, %v1141, 0.0
        %v1146 = vsel %vm696, %v1142, 0.0
        %v1147 = vadd.f32 %v1137, %v1143
        %v1148 = vadd.f32 %v1138, %v1144
        %v1149 = vadd.f32 %v1139, %v1145
        %v1150 = vadd.f32 %v1140, %v1146
        %v1151 = vperm.slane %v351, 3
        %v1152 = vperm.slane %v352, 3
        %v1153 = vsel %vm707, %v1151, 0.0
        %v1154 = vsel %vm708, %v1152, 0.0
        %v1155 = vsel %vm709, %v1151, 0.0
        %v1156 = vsel %vm710, %v1152, 0.0
        %v1157 = vadd.f32 %v1147, %v1153
        %v1158 = vadd.f32 %v1148, %v1154
        %v1159 = vadd.f32 %v1149, %v1155
        %v1160 = vadd.f32 %v1150, %v1156
        %v1161 = vperm.slane %v351, 4
        %v1162 = vperm.slane %v352, 4
        %v1163 = vsel %vm721, %v1161, 0.0
        %v1164 = vsel %vm722, %v1162, 0.0
        %v1165 = vsel %vm723, %v1161, 0.0
        %v1166 = vsel %vm724, %v1162, 0.0
        %v1167 = vadd.f32 %v1157, %v1163
        %v1168 = vadd.f32 %v1158, %v1164
        %v1169 = vadd.f32 %v1159, %v1165
        %v1170 = vadd.f32 %v1160, %v1166
        %v1171 = vperm.slane %v351, 5
        %v1172 = vperm.slane %v352, 5
        %v1173 = vsel %vm735, %v1171, 0.0
        %v1174 = vsel %vm736, %v1172, 0.0
        %v1175 = vsel %vm737, %v1171, 0.0
        %v1176 = vsel %vm738, %v1172, 0.0
        %v1177 = vadd.f32 %v1167, %v1173
        %v1178 = vadd.f32 %v1168, %v1174
        %v1179 = vadd.f32 %v1169, %v1175
        %v1180 = vadd.f32 %v1170, %v1176
        %v1181 = vperm.slane %v351, 6
        %v1182 = vperm.slane %v352, 6
        %v1183 = vsel %vm749, %v1181, 0.0
        %v1184 = vsel %vm750, %v1182, 0.0
        %v1185 = vsel %vm751, %v1181, 0.0
        %v1186 = vsel %vm752, %v1182, 0.0
        %v1187 = vadd.f32 %v1177, %v1183
        %v1188 = vadd.f32 %v1178, %v1184
        %v1189 = vadd.f32 %v1179, %v1185
        %v1190 = vadd.f32 %v1180, %v1186
        %v1191 = vperm.slane %v351, 7
        %v1192 = vperm.slane %v352, 7
        %v1193 = vsel %vm763, %v1191, 0.0
        %v1194 = vsel %vm764, %v1192, 0.0
        %v1195 = vsel %vm765, %v1191, 0.0
        %v1196 = vsel %vm766, %v1192, 0.0
        %v1197 = vadd.f32 %v1187, %v1193
        %v1198 = vadd.f32 %v1188, %v1194
        %v1199 = vadd.f32 %v1189, %v1195
        %v1200 = vadd.f32 %v1190, %v1196
        %s1201 = scalar_lea.vmem %s335, 240 [#allocation9]
        %1202 = vst [vmem:[%s1201] sm:$0xff] %v1197
        %1203 = vst [vmem:[%s1201 + $0x8] sm:$0xff] %v1198
        %1204 = vst [vmem:[%s1201 + $0x10] sm:$0xff] %v1199
        %1205 = vst [vmem:[%s1201 + $0x18] sm:$0xff] %v1200
        %v1206 = vperm.slane %v353, 0
        %v1207 = vperm.slane %v354, 0
        %v1208 = vsel %vm665, %v1206, 0.0
        %v1209 = vsel %vm666, %v1207, 0.0
        %v1210 = vsel %vm667, %v1206, 0.0
        %v1211 = vsel %vm668, %v1207, 0.0
        %v1212 = vadd.f32 %v1208, 0.0
        %v1213 = vadd.f32 %v1209, 0.0
        %v1214 = vadd.f32 %v1210, 0.0
        %v1215 = vadd.f32 %v1211, 0.0
        %v1216 = vperm.slane %v353, 1
        %v1217 = vperm.slane %v354, 1
        %v1218 = vsel %vm679, %v1216, 0.0
        %v1219 = vsel %vm680, %v1217, 0.0
        %v1220 = vsel %vm681, %v1216, 0.0
        %v1221 = vsel %vm682, %v1217, 0.0
        %v1222 = vadd.f32 %v1212, %v1218
        %v1223 = vadd.f32 %v1213, %v1219
        %v1224 = vadd.f32 %v1214, %v1220
        %v1225 = vadd.f32 %v1215, %v1221
        %v1226 = vperm.slane %v353, 2
        %v1227 = vperm.slane %v354, 2
        %v1228 = vsel %vm693, %v1226, 0.0
        %v1229 = vsel %vm694, %v1227, 0.0
        %v1230 = vsel %vm695, %v1226, 0.0
        %v1231 = vsel %vm696, %v1227, 0.0
        %v1232 = vadd.f32 %v1222, %v1228
        %v1233 = vadd.f32 %v1223, %v1229
        %v1234 = vadd.f32 %v1224, %v1230
        %v1235 = vadd.f32 %v1225, %v1231
        %v1236 = vperm.slane %v353, 3
        %v1237 = vperm.slane %v354, 3
        %v1238 = vsel %vm707, %v1236, 0.0
        %v1239 = vsel %vm708, %v1237, 0.0
        %v1240 = vsel %vm709, %v1236, 0.0
        %v1241 = vsel %vm710, %v1237, 0.0
        %v1242 = vadd.f32 %v1232, %v1238
        %v1243 = vadd.f32 %v1233, %v1239
        %v1244 = vadd.f32 %v1234, %v1240
        %v1245 = vadd.f32 %v1235, %v1241
        %v1246 = vperm.slane %v353, 4
        %v1247 = vperm.slane %v354, 4
        %v1248 = vsel %vm721, %v1246, 0.0
        %v1249 = vsel %vm722, %v1247, 0.0
        %v1250 = vsel %vm723, %v1246, 0.0
        %v1251 = vsel %vm724, %v1247, 0.0
        %v1252 = vadd.f32 %v1242, %v1248
        %v1253 = vadd.f32 %v1243, %v1249
        %v1254 = vadd.f32 %v1244, %v1250
        %v1255 = vadd.f32 %v1245, %v1251
        %v1256 = vperm.slane %v353, 5
        %v1257 = vperm.slane %v354, 5
        %v1258 = vsel %vm735, %v1256, 0.0
        %v1259 = vsel %vm736, %v1257, 0.0
        %v1260 = vsel %vm737, %v1256, 0.0
        %v1261 = vsel %vm738, %v1257, 0.0
        %v1262 = vadd.f32 %v1252, %v1258
        %v1263 = vadd.f32 %v1253, %v1259
        %v1264 = vadd.f32 %v1254, %v1260
        %v1265 = vadd.f32 %v1255, %v1261
        %v1266 = vperm.slane %v353, 6
        %v1267 = vperm.slane %v354, 6
        %v1268 = vsel %vm749, %v1266, 0.0
        %v1269 = vsel %vm750, %v1267, 0.0
        %v1270 = vsel %vm751, %v1266, 0.0
        %v1271 = vsel %vm752, %v1267, 0.0
        %v1272 = vadd.f32 %v1262, %v1268
        %v1273 = vadd.f32 %v1263, %v1269
        %v1274 = vadd.f32 %v1264, %v1270
        %v1275 = vadd.f32 %v1265, %v1271
        %v1276 = vperm.slane %v353, 7
        %v1277 = vperm.slane %v354, 7
        %v1278 = vsel %vm763, %v1276, 0.0
        %v1279 = vsel %vm764, %v1277, 0.0
        %v1280 = vsel %vm765, %v1276, 0.0
        %v1281 = vsel %vm766, %v1277, 0.0
        %v1282 = vadd.f32 %v1272, %v1278
        %v1283 = vadd.f32 %v1273, %v1279
        %v1284 = vadd.f32 %v1274, %v1280
        %v1285 = vadd.f32 %v1275, %v1281
        %s1286 = scalar_lea.vmem %s335, 288 [#allocation9]
        %1287 = vst [vmem:[%s1286] sm:$0xff] %v1282
        %1288 = vst [vmem:[%s1286 + $0x8] sm:$0xff] %v1283
        %1289 = vst [vmem:[%s1286 + $0x10] sm:$0xff] %v1284
        %1290 = vst [vmem:[%s1286 + $0x18] sm:$0xff] %v1285
        %v1291 = vperm.slane %v355, 0
        %v1292 = vperm.slane %v356, 0
        %v1293 = vsel %vm665, %v1291, 0.0
        %v1294 = vsel %vm666, %v1292, 0.0
        %v1295 = vsel %vm667, %v1291, 0.0
        %v1296 = vsel %vm668, %v1292, 0.0
        %v1297 = vadd.f32 %v1293, 0.0
        %v1298 = vadd.f32 %v1294, 0.0
        %v1299 = vadd.f32 %v1295, 0.0
        %v1300 = vadd.f32 %v1296, 0.0
        %v1301 = vperm.slane %v355, 1
        %v1302 = vperm.slane %v356, 1
        %v1303 = vsel %vm679, %v1301, 0.0
        %v1304 = vsel %vm680, %v1302, 0.0
        %v1305 = vsel %vm681, %v1301, 0.0
        %v1306 = vsel %vm682, %v1302, 0.0
        %v1307 = vadd.f32 %v1297, %v1303
        %v1308 = vadd.f32 %v1298, %v1304
        %v1309 = vadd.f32 %v1299, %v1305
        %v1310 = vadd.f32 %v1300, %v1306
        %v1311 = vperm.slane %v355, 2
        %v1312 = vperm.slane %v356, 2
        %v1313 = vsel %vm693, %v1311, 0.0
        %v1314 = vsel %vm694, %v1312, 0.0
        %v1315 = vsel %vm695, %v1311, 0.0
        %v1316 = vsel %vm696, %v1312, 0.0
        %v1317 = vadd.f32 %v1307, %v1313
        %v1318 = vadd.f32 %v1308, %v1314
        %v1319 = vadd.f32 %v1309, %v1315
        %v1320 = vadd.f32 %v1310, %v1316
        %v1321 = vperm.slane %v355, 3
        %v1322 = vperm.slane %v356, 3
        %v1323 = vsel %vm707, %v1321, 0.0
        %v1324 = vsel %vm708, %v1322, 0.0
        %v1325 = vsel %vm709, %v1321, 0.0
        %v1326 = vsel %vm710, %v1322, 0.0
        %v1327 = vadd.f32 %v1317, %v1323
        %v1328 = vadd.f32 %v1318, %v1324
        %v1329 = vadd.f32 %v1319, %v1325
        %v1330 = vadd.f32 %v1320, %v1326
        %v1331 = vperm.slane %v355, 4
        %v1332 = vperm.slane %v356, 4
        %v1333 = vsel %vm721, %v1331, 0.0
        %v1334 = vsel %vm722, %v1332, 0.0
        %v1335 = vsel %vm723, %v1331, 0.0
        %v1336 = vsel %vm724, %v1332, 0.0
        %v1337 = vadd.f32 %v1327, %v1333
        %v1338 = vadd.f32 %v1328, %v1334
        %v1339 = vadd.f32 %v1329, %v1335
        %v1340 = vadd.f32 %v1330, %v1336
        %v1341 = vperm.slane %v355, 5
        %v1342 = vperm.slane %v356, 5
        %v1343 = vsel %vm735, %v1341, 0.0
        %v1344 = vsel %vm736, %v1342, 0.0
        %v1345 = vsel %vm737, %v1341, 0.0
        %v1346 = vsel %vm738, %v1342, 0.0
        %v1347 = vadd.f32 %v1337, %v1343
        %v1348 = vadd.f32 %v1338, %v1344
        %v1349 = vadd.f32 %v1339, %v1345
        %v1350 = vadd.f32 %v1340, %v1346
        %v1351 = vperm.slane %v355, 6
        %v1352 = vperm.slane %v356, 6
        %v1353 = vsel %vm749, %v1351, 0.0
        %v1354 = vsel %vm750, %v1352, 0.0
        %v1355 = vsel %vm751, %v1351, 0.0
        %v1356 = vsel %vm752, %v1352, 0.0
        %v1357 = vadd.f32 %v1347, %v1353
        %v1358 = vadd.f32 %v1348, %v1354
        %v1359 = vadd.f32 %v1349, %v1355
        %v1360 = vadd.f32 %v1350, %v1356
        %v1361 = vperm.slane %v355, 7
        %v1362 = vperm.slane %v356, 7
        %v1363 = vsel %vm763, %v1361, 0.0
        %v1364 = vsel %vm764, %v1362, 0.0
        %v1365 = vsel %vm765, %v1361, 0.0
        %v1366 = vsel %vm766, %v1362, 0.0
        %v1367 = vadd.f32 %v1357, %v1363
        %v1368 = vadd.f32 %v1358, %v1364
        %v1369 = vadd.f32 %v1359, %v1365
        %v1370 = vadd.f32 %v1360, %v1366
        %s1371 = scalar_lea.vmem %s335, 336 [#allocation9]
        %1372 = vst [vmem:[%s1371] sm:$0xff] %v1367
        %1373 = vst [vmem:[%s1371 + $0x8] sm:$0xff] %v1368
        %1374 = vst [vmem:[%s1371 + $0x10] sm:$0xff] %v1369
        %1375 = vst [vmem:[%s1371 + $0x18] sm:$0xff] %v1370
        %v1376 = vperm.slane %v357, 0
        %v1377 = vperm.slane %v358, 0
        %v1378 = vsel %vm665, %v1376, 0.0
        %v1379 = vsel %vm666, %v1377, 0.0
        %v1380 = vsel %vm667, %v1376, 0.0
        %v1381 = vsel %vm668, %v1377, 0.0
        %v1382 = vadd.f32 %v1378, 0.0
        %v1383 = vadd.f32 %v1379, 0.0
        %v1384 = vadd.f32 %v1380, 0.0
        %v1385 = vadd.f32 %v1381, 0.0
        %v1386 = vperm.slane %v357, 1
        %v1387 = vperm.slane %v358, 1
        %v1388 = vsel %vm679, %v1386, 0.0
        %v1389 = vsel %vm680, %v1387, 0.0
        %v1390 = vsel %vm681, %v1386, 0.0
        %v1391 = vsel %vm682, %v1387, 0.0
        %v1392 = vadd.f32 %v1382, %v1388
        %v1393 = vadd.f32 %v1383, %v1389
        %v1394 = vadd.f32 %v1384, %v1390
        %v1395 = vadd.f32 %v1385, %v1391
        %v1396 = vperm.slane %v357, 2
        %v1397 = vperm.slane %v358, 2
        %v1398 = vsel %vm693, %v1396, 0.0
        %v1399 = vsel %vm694, %v1397, 0.0
        %v1400 = vsel %vm695, %v1396, 0.0
        %v1401 = vsel %vm696, %v1397, 0.0
        %v1402 = vadd.f32 %v1392, %v1398
        %v1403 = vadd.f32 %v1393, %v1399
        %v1404 = vadd.f32 %v1394, %v1400
        %v1405 = vadd.f32 %v1395, %v1401
        %v1406 = vperm.slane %v357, 3
        %v1407 = vperm.slane %v358, 3
        %v1408 = vsel %vm707, %v1406, 0.0
        %v1409 = vsel %vm708, %v1407, 0.0
        %v1410 = vsel %vm709, %v1406, 0.0
        %v1411 = vsel %vm710, %v1407, 0.0
        %v1412 = vadd.f32 %v1402, %v1408
        %v1413 = vadd.f32 %v1403, %v1409
        %v1414 = vadd.f32 %v1404, %v1410
        %v1415 = vadd.f32 %v1405, %v1411
        %v1416 = vperm.slane %v357, 4
        %v1417 = vperm.slane %v358, 4
        %v1418 = vsel %vm721, %v1416, 0.0
        %v1419 = vsel %vm722, %v1417, 0.0
        %v1420 = vsel %vm723, %v1416, 0.0
        %v1421 = vsel %vm724, %v1417, 0.0
        %v1422 = vadd.f32 %v1412, %v1418
        %v1423 = vadd.f32 %v1413, %v1419
        %v1424 = vadd.f32 %v1414, %v1420
        %v1425 = vadd.f32 %v1415, %v1421
        %v1426 = vperm.slane %v357, 5
        %v1427 = vperm.slane %v358, 5
        %v1428 = vsel %vm735, %v1426, 0.0
        %v1429 = vsel %vm736, %v1427, 0.0
        %v1430 = vsel %vm737, %v1426, 0.0
        %v1431 = vsel %vm738, %v1427, 0.0
        %v1432 = vadd.f32 %v1422, %v1428
        %v1433 = vadd.f32 %v1423, %v1429
        %v1434 = vadd.f32 %v1424, %v1430
        %v1435 = vadd.f32 %v1425, %v1431
        %v1436 = vperm.slane %v357, 6
        %v1437 = vperm.slane %v358, 6
        %v1438 = vsel %vm749, %v1436, 0.0
        %v1439 = vsel %vm750, %v1437, 0.0
        %v1440 = vsel %vm751, %v1436, 0.0
        %v1441 = vsel %vm752, %v1437, 0.0
        %v1442 = vadd.f32 %v1432, %v1438
        %v1443 = vadd.f32 %v1433, %v1439
        %v1444 = vadd.f32 %v1434, %v1440
        %v1445 = vadd.f32 %v1435, %v1441
        %v1446 = vperm.slane %v357, 7
        %v1447 = vperm.slane %v358, 7
        %v1448 = vsel %vm763, %v1446, 0.0
        %v1449 = vsel %vm764, %v1447, 0.0
        %v1450 = vsel %vm765, %v1446, 0.0
        %v1451 = vsel %vm766, %v1447, 0.0
        %v1452 = vadd.f32 %v1442, %v1448
        %v1453 = vadd.f32 %v1443, %v1449
        %v1454 = vadd.f32 %v1444, %v1450
        %v1455 = vadd.f32 %v1445, %v1451
        %s1456 = scalar_lea.vmem %s335, 384 [#allocation9]
        %1457 = vst [vmem:[%s1456] sm:$0xff] %v1452
        %1458 = vst [vmem:[%s1456 + $0x8] sm:$0xff] %v1453
        %1459 = vst [vmem:[%s1456 + $0x10] sm:$0xff] %v1454
        %1460 = vst [vmem:[%s1456 + $0x18] sm:$0xff] %v1455
        %1461 = vst [vmem:[%s335 + $0x20] sm:$0xff] %v341
        %1462 = vst [vmem:[%s335 + $0x28] sm:$0xff] %v342
        %1463 = vst [vmem:[%s335 + $0x50] sm:$0xff] %v343
        %1464 = vst [vmem:[%s335 + $0x58] sm:$0xff] %v344
        %1465 = vst [vmem:[%s335 + $0x80] sm:$0xff] %v345
        %1466 = vst [vmem:[%s335 + $0x88] sm:$0xff] %v346
        %1467 = vst [vmem:[%s335 + $0xb0] sm:$0xff] %v347
        %1468 = vst [vmem:[%s335 + $0xb8] sm:$0xff] %v348
        %1469 = vst [vmem:[%s335 + $0xe0] sm:$0xff] %v349
        %1470 = vst [vmem:[%s335 + $0xe8] sm:$0xff] %v350
        %1471 = vst [vmem:[%s335 + $0x110] sm:$0xff] %v351
        %1472 = vst [vmem:[%s335 + $0x118] sm:$0xff] %v352
        %1473 = vst [vmem:[%s335 + $0x140] sm:$0xff] %v353
        %1474 = vst [vmem:[%s335 + $0x148] sm:$0xff] %v354
        %1475 = vst [vmem:[%s335 + $0x170] sm:$0xff] %v355
        %1476 = vst [vmem:[%s335 + $0x178] sm:$0xff] %v356
        %1477 = vst [vmem:[%s335 + $0x1a0] sm:$0xff] %v357
        %1478 = vst [vmem:[%s335 + $0x1a8] sm:$0xff] %v358
        %s1479 = sand.u32 %s134, 1
        %s1480 = scalar_lea.sflag [#allocation4], %s1479
        %s1481 = sand.u32 %s134, 1
        %s1482 = smul.addr %s1481, 48
        %s1483 = scalar_lea.vmem [#allocation8], %s1482
        %s1484 = sand.u32 %s162, 1
        %s1485 = scalar_lea.sflag [#allocation10], %s1484
        %s1486 = sand.u32 %s162, 1
        %s1487 = smul.addr %s1486, 432
        %s1488 = scalar_lea.vmem [#allocation9], %s1487
        // Predicated region
        $region45: #{tpu_custom_call.1} parent=31 // pred_check
          %p1489 = pneg %p144
        $region46: #{tpu_custom_call.1} parent=31 // pred_check_branch
          %1491 = sbr.rel (%p1489) target = $region48
        $region47: #{tpu_custom_call.1} parent=31 // pred_region
          %s1492 = smul.u32 2, %s33
          %1494 = vsyncadd %s1480, 0
          %s1495 = smul.addr %s32, 6
          %s1496 = sadd.s32 %s1492, %s1495
          %s1497 = smul.addr %s1496, 8
          %s1498 = scalar_lea.hbm %s3, %s1497
          %s1499 = sshll.u32 %s1483, 4
          %s1500 = int_to_ptr.vmem [resolvable:$true] %s1499
          %s1501 = sshll.u32 %s1498, 4
          %s1502 = int_to_ptr.hbm [resolvable:$true] %s1501
          %1507 = dma.vmem_to_hbm [thread:$0]  %s1500, 768, %s1502, %s1480, 256, 256, 16
        $region48: #{tpu_custom_call.1} parent=31 // pred_fallthru
          _
        // Predicated region
        $region49: #{tpu_custom_call.1} parent=31 // pred_check
          %p1508 = pneg %p172
        $region50: #{tpu_custom_call.1} parent=31 // pred_check_branch
          %1510 = sbr.rel (%p1508) target = $region52
        $region51: #{tpu_custom_call.1} parent=31 // pred_region
          %s1511 = smul.u32 2, %s33
          %1513 = vsyncadd %s1485, 0
          %s1514 = smul.addr %s32, 54
          %s1515 = sadd.s32 %s1511, %s1514
          %s1516 = smul.addr %s1515, 8
          %s1517 = scalar_lea.hbm %s4, %s1516
          %s1518 = sshll.u32 %s1488, 4
          %s1519 = int_to_ptr.vmem [resolvable:$true] %s1518
          %s1520 = sshll.u32 %s1517, 4
          %s1521 = int_to_ptr.hbm [resolvable:$true] %s1520
          %1526 = dma.vmem_to_hbm [thread:$0]  %s1519, 6912, %s1521, %s1485, 256, 256, 16
        $region52: #{tpu_custom_call.1} parent=31 // pred_fallthru
          _
      $region32: #{tpu_custom_call.1} parent=5 // pred_fallthru
        _
      %p1527 = scmp.le.s32.totalorder 2, %s23
      // Predicated region
      $region53: #{tpu_custom_call.1} parent=5 // pred_check
        %p1528 = pneg %p1527
      $region54: #{tpu_custom_call.1} parent=5 // pred_check_branch
        %1530 = sbr.rel (%p1528) target = $region56
      $region55: #{tpu_custom_call.1} parent=5 // pred_region
        %s1531 = ssub.s32 %s23, 2
        // Predicated region
        $region57: #{tpu_custom_call.1} parent=55 // pred_check
          %p1532 = pneg %p150
        $region58: #{tpu_custom_call.1} parent=55 // pred_check_branch
          %1534 = sbr.rel (%p1532) target = $region60
        $region59: #{tpu_custom_call.1} parent=55 // pred_region
          %s1535 = sand.u32 %s135, 1
          %s1536 = scalar_lea.sflag [#allocation4], %s1535
          %s1537 = sand.u32 %s135, 1
          %s1538 = smul.addr %s1537, 48
          %s1539 = scalar_lea.vmem [#allocation8], %s1538
          %1541 = dma.done %s1536, 768
        $region60: #{tpu_custom_call.1} parent=55 // pred_fallthru
          _
        // Predicated region
        $region61: #{tpu_custom_call.1} parent=55 // pred_check
          %p1542 = pneg %p178
        $region62: #{tpu_custom_call.1} parent=55 // pred_check_branch
          %1544 = sbr.rel (%p1542) target = $region64
        $region63: #{tpu_custom_call.1} parent=55 // pred_region
          %s1545 = sand.u32 %s163, 1
          %s1546 = scalar_lea.sflag [#allocation10], %s1545
          %s1547 = sand.u32 %s163, 1
          %s1548 = smul.addr %s1547, 432
          %s1549 = scalar_lea.vmem [#allocation9], %s1548
          %1551 = dma.done %s1546, 6912
        $region64: #{tpu_custom_call.1} parent=55 // pred_fallthru
          _
      $region56: #{tpu_custom_call.1} parent=5 // pred_fallthru
        _
    $region6: #{tpu_custom_call.1} parent=1 // loop_footer
      %s27 = sadd.s32 1, %s23
    $region7: #{tpu_custom_call.1} parent=1 // loop_footer_branch
      %22 = sbr.rel target = $region3
    $region8: #{tpu_custom_call.1} parent=1 // loop_exit
      _
    %1552 = vsyncpa [#allocation3], 1
    %s1553 = scalar_lea.sflag [#allocation3], 1
    %1554 = vsyncpa %s1553, 1
    %1555 = vsyncpa [#allocation6], 1
    %s1556 = scalar_lea.sflag [#allocation6], 1
    %1557 = vsyncpa %s1556, 1
    %1558 = vsyncpa [#allocation4], 1
    %s1559 = scalar_lea.sflag [#allocation4], 1
    %1560 = vsyncpa %s1559, 1
    %1561 = vsyncpa [#allocation10], 1
    %s1562 = scalar_lea.sflag [#allocation10], 1
    %1563 = vsyncpa %s1562, 1

</llo_original>
